<compile_context>
chip_gen: v6e
topology: v6e:2x2x1
jax: 0.10.0
libtpu: 0.0.40
codegen_flags: <defaults>
</compile_context>

<pallas_src>
import jax
import jax.numpy as jnp
from jax.experimental import pallas as pl
from jax.experimental.pallas import tpu as pltpu


def mlp_kernel(xpad_ref, wconv_ref, cscale_ref, cshift_ref,
               w1_ref, s1_ref, sh1_ref,
               w2_ref, s2_ref, sh2_ref,
               w3_ref, b3_ref,
               out_ref):
    """One grid step = `block_n` batch elements.

    xpad_ref : (block_n, H+2, W+2, C) f32  zero-padded NHWC conv input
    wconv_ref: (9, C, C)              bf16 conv weight, tap-major (dy*3+dx)
    cscale/cshift : (1, C)            f32  folded BatchNorm2d (eval)
    w1, w2   : (C, H1), (H1, H2)      bf16 linear weights (in, out)
    s*/sh*   : (1, H*)                f32  folded fc-bias + BatchNorm1d (eval)
    w3, b3   : (H2, KP), (1, KP)      bf16/f32, lane-padded; padded bias=-1e30
    out_ref  : (1, block_n, KP)       bf16 softmax probabilities (lane-dense)
    """
    bn, hp, wp, c = xpad_ref.shape
    hh, ww = hp - 2, wp - 2
    hw = hh * ww
    m = bn * hw

    # ---- Conv3x3 (pad=1): 9 shifted-tap MXU matmuls, f32 accumulation ------
    acc = jnp.zeros((m, c), jnp.float32)
    for dy in range(3):
        for dx in range(3):
            tap = xpad_ref[:, dy:dy + hh, dx:dx + ww, :].reshape(m, c)
            acc = acc + jnp.dot(tap.astype(jnp.bfloat16),
                                wconv_ref[dy * 3 + dx],
                                preferred_element_type=jnp.float32)
    # TODO(synk): for block_n*H*W >> 512, chunk this tap loop over 256-512-row
    # M blocks (accumulating the pooled sum per chunk) to bound vreg pressure.

    # ---- BatchNorm2d (eval, folded) + ReLU6 ---------------------------------
    y = jnp.clip(acc * cscale_ref[...] + cshift_ref[...], 0.0, 6.0)

    # ---- AdaptiveAvgPool2d(1) + squeeze -------------------------------------
    feats = y.reshape(bn, hw, c).sum(axis=1) * (1.0 / hw)          # (block_n, C)

    # ---- fc1 + bn1 (folded) + ReLU   (dropout1: eval -> identity) -----------
    hid = jnp.dot(feats.astype(jnp.bfloat16), w1_ref[...],
                  preferred_element_type=jnp.float32)
    hid = jnp.maximum(hid * s1_ref[...] + sh1_ref[...], 0.0)

    # ---- fc2 + bn2 (folded) + ReLU   (dropout2: eval -> identity) -----------
    hid = jnp.dot(hid.astype(jnp.bfloat16), w2_ref[...],
                  preferred_element_type=jnp.float32)
    hid = jnp.maximum(hid * s2_ref[...] + sh2_ref[...], 0.0)

    # ---- fc3 + softmax (return_logits=False); padded lanes get exp() == 0 ---
    logits = jnp.dot(hid.astype(jnp.bfloat16), w3_ref[...],
                     preferred_element_type=jnp.float32) + b3_ref[...]
    e = jnp.exp(logits - jnp.max(logits, axis=-1, keepdims=True))
    probs = e / jnp.sum(e, axis=-1, keepdims=True)                 # exact divide
    out_ref[0] = probs.astype(out_ref.dtype)


# TODO(synk): training-mode BatchNorm (batch statistics) and stochastic Dropout
# are not implemented; this kernel reproduces eval()/inference semantics.


def _tensorcores_per_chip():
    """Best-effort TensorCore count per chip: 1 on v5e/v6e, 2 on v7x/v4/v5p."""
    try:
        kind = jax.devices()[0].device_kind.lower()
    except Exception:
        return 1
    single_tc = ("v5e", "v5 lite", "v5lite", "v6e", "v6 lite", "v6lite", "trillium")
    return 1 if any(tag in kind for tag in single_tc) else 2


def mlp_forward(x_nchw, params):
    eps = 1e-5
    N, C, H, W = x_nchw.shape

    # Only wrapper-side prep: NHWC transpose + zero pad (pad=1).  The 9-tap
    # im2col now happens inside the kernel, so HBM holds (H+2)(W+2)C floats
    # per element instead of the old 9*H*W*C im2col slab.
    xpad = jnp.pad(jnp.transpose(x_nchw, (0, 2, 3, 1)).astype(jnp.float32),
                   ((0, 0), (1, 1), (1, 1), (0, 0)))               # (N,H+2,W+2,C)

    # Conv weight (O, I, 3, 3) -> (tap, I, O); tap = dy*3 + dx matches the
    # kernel's shifted slices.
    wconv = jnp.transpose(params["conv_w"], (2, 3, 1, 0)).reshape(9, C, C)
    wconv = wconv.astype(jnp.bfloat16)

    # Fold conv BatchNorm2d (eval) into scale/shift.
    cscale = params["bn_c_gamma"] / jnp.sqrt(params["bn_c_var"] + eps)
    cshift = params["bn_c_beta"] - params["bn_c_mean"] * cscale

    # Fold fc bias + BatchNorm1d (eval) into scale/shift.
    s1 = params["bn1_gamma"] / jnp.sqrt(params["bn1_var"] + eps)
    sh1 = params["bn1_beta"] + s1 * (params["fc1_b"] - params["bn1_mean"])
    s2 = params["bn2_gamma"] / jnp.sqrt(params["bn2_var"] + eps)
    sh2 = params["bn2_beta"] + s2 * (params["fc2_b"] - params["bn2_mean"])

    w1 = params["fc1_w"].T.astype(jnp.bfloat16)                    # (C, H1)
    w2 = params["fc2_w"].T.astype(jnp.bfloat16)                    # (H1, H2)

    K = params["fc3_w"].shape[0]
    KP = ((K + 127) // 128) * 128                                  # lane-dense out
    w3 = jnp.pad(params["fc3_w"].T, ((0, 0), (0, KP - K))).astype(jnp.bfloat16)
    b3 = jnp.pad(params["fc3_b"].astype(jnp.float32), (0, KP - K),
                 constant_values=-1e30).reshape(1, KP)

    # Generation-aware batch blocking: split across grid steps only on chips
    # with 2 TensorCores; on v5e/v6e one step keeps conv M = N*H*W full and
    # avoids per-step pipeline overhead.
    if _tensorcores_per_chip() >= 2 and N >= 2 and N % 2 == 0:
        block_n = N // 2
    else:
        block_n = N
    G = N // block_n
    # If N ever grows: cap block_n so 2x the (block_n,H+2,W+2,C) f32 input
    # buffers + the (block_n*H*W, C) f32 conv activation stay inside the
    # scoped-VMEM limit (64 MiB physical on v7x) -- irrelevant at demo shapes.

    row = lambda v: v.reshape(1, -1).astype(jnp.float32)
    args = (xpad, wconv, row(cscale), row(cshift),
            w1, row(s1), row(sh1),
            w2, row(s2), row(sh2),
            w3, b3)

    def resident(a):                       # grid-invariant: always block 0
        zeros = (0,) * a.ndim
        return pl.BlockSpec(a.shape, lambda i: zeros)

    in_specs = ([pl.BlockSpec((block_n, H + 2, W + 2, C),
                              lambda i: (i, 0, 0, 0))]
                + [resident(a) for a in args[1:]])
    out_spec = pl.BlockSpec((1, block_n, KP), lambda i: (i, 0, 0))

    out = pl.pallas_call(
        mlp_kernel,
        out_shape=jax.ShapeDtypeStruct((G, block_n, KP), jnp.bfloat16),
        grid_spec=pltpu.PrefetchScalarGridSpec(
            num_scalar_prefetch=0, grid=(G,),
            in_specs=in_specs, out_specs=out_spec),
        compiler_params=pltpu.CompilerParams(
            dimension_semantics=("parallel",)),
    )(*args)

    return out.reshape(N, KP)[:, :K].astype(jnp.float32)


def mlp_reference(x_nchw, params):
    """Pure-JAX f32 reference (mirrors PyTorch eval-mode forward)."""
    eps = 1e-5
    x = jnp.transpose(x_nchw, (0, 2, 3, 1)).astype(jnp.float32)
    w = jnp.transpose(params["conv_w"], (2, 3, 1, 0))
    y = jax.lax.conv_general_dilated(
        x, w, window_strides=(1, 1), padding="SAME",
        dimension_numbers=("NHWC", "HWIO", "NHWC"))
    scale = params["bn_c_gamma"] / jnp.sqrt(params["bn_c_var"] + eps)
    y = y * scale + (params["bn_c_beta"] - params["bn_c_mean"] * scale)
    y = jnp.clip(y, 0.0, 6.0)
    f = jnp.mean(y, axis=(1, 2))                                   # pool + squeeze
    h = f @ params["fc1_w"].T + params["fc1_b"]
    h = (h - params["bn1_mean"]) * (params["bn1_gamma"] /
                                    jnp.sqrt(params["bn1_var"] + eps)) + params["bn1_beta"]
    h = jnp.maximum(h, 0.0)
    h = h @ params["fc2_w"].T + params["fc2_b"]
    h = (h - params["bn2_mean"]) * (params["bn2_gamma"] /
                                    jnp.sqrt(params["bn2_var"] + eps)) + params["bn2_beta"]
    h = jnp.maximum(h, 0.0)
    logits = h @ params["fc3_w"].T + params["fc3_b"]
    return jax.nn.softmax(logits, axis=1)


def init_params(key, in_ch, hidden_ch, num_classes):
    ks = jax.random.split(key, 16)
    u = lambda k, s, a=0.05: (jax.random.normal(k, s, jnp.float32) * a)
    return {
        "conv_w": u(ks[0], (in_ch, in_ch, 3, 3)),
        "bn_c_gamma": 1.0 + u(ks[1], (in_ch,)),
        "bn_c_beta": u(ks[2], (in_ch,)),
        "bn_c_mean": u(ks[3], (in_ch,)),
        "bn_c_var": jax.random.uniform(ks[4], (in_ch,), jnp.float32, 0.5, 1.5),
        "fc1_w": u(ks[5], (hidden_ch[0], in_ch)),
        "fc1_b": u(ks[6], (hidden_ch[0],)),
        "bn1_gamma": 1.0 + u(ks[7], (hidden_ch[0],)),
        "bn1_beta": u(ks[8], (hidden_ch[0],)),
        "bn1_mean": u(ks[9], (hidden_ch[0],)),
        "bn1_var": jax.random.uniform(ks[10], (hidden_ch[0],), jnp.float32, 0.5, 1.5),
        "fc2_w": u(ks[11], (hidden_ch[1], hidden_ch[0])),
        "fc2_b": u(ks[12], (hidden_ch[1],)),
        "bn2_gamma": 1.0 + u(ks[13], (hidden_ch[1],)),
        "bn2_beta": u(ks[14], (hidden_ch[1],)),
        "bn2_mean": u(ks[15], (hidden_ch[1],)),
        "bn2_var": jnp.ones((hidden_ch[1],), jnp.float32),
        "fc3_w": u(jax.random.fold_in(key, 100), (num_classes, hidden_ch[1])),
        "fc3_b": u(jax.random.fold_in(key, 101), (num_classes,)),
    }


if __name__ == "__main__":
    # Small shapes consistent with the module: in_ch channels feed both the
    # 3x3 conv and fc1; batch >= 2 so .squeeze() yields (N, C).
    N, IN_CH, H, W = 4, 128, 8, 8
    HIDDEN = [128, 128]
    NUM_CLASSES = 9

    key = jax.random.PRNGKey(0)
    kx, kp = jax.random.split(key)
    x = jax.random.normal(kx, (N, IN_CH, H, W), jnp.float32)   # PyTorch-style NCHW
    params = init_params(kp, IN_CH, HIDDEN, NUM_CLASSES)

    out = jax.block_until_ready(mlp_forward(x, params))
    ref = jax.block_until_ready(mlp_reference(x, params))

    assert out.shape == (N, NUM_CLASSES)
    # bf16 MXU operands + bf16 output rounding -> loosened tolerances.
    assert jnp.allclose(jnp.sum(out, axis=1), 1.0, atol=5e-3)
    assert jnp.allclose(out, ref, atol=3e-3, rtol=2e-2), "mismatch vs JAX reference"
    print("KERNEL_OK")
</pallas_src>

<mosaic_0001>
module attributes {stable_mosaic.version = 11 : i64} {
  func.func @mlp_kernel(%arg0: i32, %arg1: memref<2x10x10x128xf32, #tpu.memory_space<vmem>>, %arg2: memref<9x128x128xbf16, #tpu.memory_space<vmem>>, %arg3: memref<1x128xf32, #tpu.memory_space<vmem>>, %arg4: memref<1x128xf32, #tpu.memory_space<vmem>>, %arg5: memref<128x128xbf16, #tpu.memory_space<vmem>>, %arg6: memref<1x128xf32, #tpu.memory_space<vmem>>, %arg7: memref<1x128xf32, #tpu.memory_space<vmem>>, %arg8: memref<128x128xbf16, #tpu.memory_space<vmem>>, %arg9: memref<1x128xf32, #tpu.memory_space<vmem>>, %arg10: memref<1x128xf32, #tpu.memory_space<vmem>>, %arg11: memref<128x128xbf16, #tpu.memory_space<vmem>>, %arg12: memref<1x128xf32, #tpu.memory_space<vmem>>, %arg13: memref<1x2x128xbf16, #tpu.memory_space<vmem>>) attributes {dimension_semantics = [#tpu.dimension_semantics<parallel>], iteration_bounds = array<i64: 2>, scalar_prefetch = 0 : i64, scratch_operands = 0 : i64, tpu.core_type = #tpu.core_type<tc>, window_params = [{transform_indices = @transform_0, window_bounds = array<i64: 2, 10, 10, 128>}, {pipeline_mode = #tpu.pipeline_mode<synchronous>, transform_indices = @transform_1, window_bounds = array<i64: 9, 128, 128>}, {pipeline_mode = #tpu.pipeline_mode<synchronous>, transform_indices = @transform_2, window_bounds = array<i64: 1, 128>}, {pipeline_mode = #tpu.pipeline_mode<synchronous>, transform_indices = @transform_3, window_bounds = array<i64: 1, 128>}, {pipeline_mode = #tpu.pipeline_mode<synchronous>, transform_indices = @transform_4, window_bounds = array<i64: 128, 128>}, {pipeline_mode = #tpu.pipeline_mode<synchronous>, transform_indices = @transform_5, window_bounds = array<i64: 1, 128>}, {pipeline_mode = #tpu.pipeline_mode<synchronous>, transform_indices = @transform_6, window_bounds = array<i64: 1, 128>}, {pipeline_mode = #tpu.pipeline_mode<synchronous>, transform_indices = @transform_7, window_bounds = array<i64: 128, 128>}, {pipeline_mode = #tpu.pipeline_mode<synchronous>, transform_indices = @transform_8, window_bounds = array<i64: 1, 128>}, {pipeline_mode = #tpu.pipeline_mode<synchronous>, transform_indices = @transform_9, window_bounds = array<i64: 1, 128>}, {pipeline_mode = #tpu.pipeline_mode<synchronous>, transform_indices = @transform_10, window_bounds = array<i64: 128, 128>}, {pipeline_mode = #tpu.pipeline_mode<synchronous>, transform_indices = @transform_11, window_bounds = array<i64: 1, 128>}, {transform_indices = @transform_12, window_bounds = array<i64: 1, 2, 128>}]} {
    %cst = arith.constant 0.000000e+00 : f32
    %0 = vector.broadcast %cst : f32 to vector<128x128xf32>
    %c0 = arith.constant 0 : index
    %c0_0 = arith.constant 0 : index
    %c0_1 = arith.constant 0 : index
    %c0_2 = arith.constant 0 : index
    %1 = vector.load %arg1[%c0, %c0_0, %c0_1, %c0_2] : memref<2x10x10x128xf32, #tpu.memory_space<vmem>>, vector<2x8x8x128xf32>
    %2 = vector.shape_cast %1 : vector<2x8x8x128xf32> to vector<128x128xf32>
    %3 = arith.truncf %2 : vector<128x128xf32> to vector<128x128xbf16>
    %c0_3 = arith.constant 0 : index
    %c0_4 = arith.constant 0 : index
    %c0_5 = arith.constant 0 : index
    %4 = vector.load %arg2[%c0_3, %c0_4, %c0_5] : memref<9x128x128xbf16, #tpu.memory_space<vmem>>, vector<1x128x128xbf16>
    %5 = vector.shape_cast %4 : vector<1x128x128xbf16> to vector<128x128xbf16>
    %cst_6 = arith.constant dense<0.000000e+00> : vector<128x128xf32>
    %6 = tpu.matmul %3, %5, %cst_6 {dimension_numbers = #tpu.dot_dimension_numbers<[1], [0], [0], [1], [0, 0, 1, 1], [], []>} : vector<128x128xbf16>, vector<128x128xbf16>, vector<128x128xf32> -> vector<128x128xf32>
    %7 = arith.addf %0, %6 : vector<128x128xf32>
    %c0_7 = arith.constant 0 : index
    %c0_8 = arith.constant 0 : index
    %c1 = arith.constant 1 : index
    %c0_9 = arith.constant 0 : index
    %8 = vector.load %arg1[%c0_7, %c0_8, %c1, %c0_9] : memref<2x10x10x128xf32, #tpu.memory_space<vmem>>, vector<2x8x8x128xf32>
    %9 = vector.shape_cast %8 : vector<2x8x8x128xf32> to vector<128x128xf32>
    %10 = arith.truncf %9 : vector<128x128xf32> to vector<128x128xbf16>
    %c1_10 = arith.constant 1 : index
    %c0_11 = arith.constant 0 : index
    %c0_12 = arith.constant 0 : index
    %11 = vector.load %arg2[%c1_10, %c0_11, %c0_12] : memref<9x128x128xbf16, #tpu.memory_space<vmem>>, vector<1x128x128xbf16>
    %12 = vector.shape_cast %11 : vector<1x128x128xbf16> to vector<128x128xbf16>
    %cst_13 = arith.constant dense<0.000000e+00> : vector<128x128xf32>
    %13 = tpu.matmul %10, %12, %cst_13 {dimension_numbers = #tpu.dot_dimension_numbers<[1], [0], [0], [1], [0, 0, 1, 1], [], []>} : vector<128x128xbf16>, vector<128x128xbf16>, vector<128x128xf32> -> vector<128x128xf32>
    %14 = arith.addf %7, %13 : vector<128x128xf32>
    %c0_14 = arith.constant 0 : index
    %c0_15 = arith.constant 0 : index
    %c2 = arith.constant 2 : index
    %c0_16 = arith.constant 0 : index
    %15 = vector.load %arg1[%c0_14, %c0_15, %c2, %c0_16] : memref<2x10x10x128xf32, #tpu.memory_space<vmem>>, vector<2x8x8x128xf32>
    %16 = vector.shape_cast %15 : vector<2x8x8x128xf32> to vector<128x128xf32>
    %17 = arith.truncf %16 : vector<128x128xf32> to vector<128x128xbf16>
    %c2_17 = arith.constant 2 : index
    %c0_18 = arith.constant 0 : index
    %c0_19 = arith.constant 0 : index
    %18 = vector.load %arg2[%c2_17, %c0_18, %c0_19] : memref<9x128x128xbf16, #tpu.memory_space<vmem>>, vector<1x128x128xbf16>
    %19 = vector.shape_cast %18 : vector<1x128x128xbf16> to vector<128x128xbf16>
    %cst_20 = arith.constant dense<0.000000e+00> : vector<128x128xf32>
    %20 = tpu.matmul %17, %19, %cst_20 {dimension_numbers = #tpu.dot_dimension_numbers<[1], [0], [0], [1], [0, 0, 1, 1], [], []>} : vector<128x128xbf16>, vector<128x128xbf16>, vector<128x128xf32> -> vector<128x128xf32>
    %21 = arith.addf %14, %20 : vector<128x128xf32>
    %c0_21 = arith.constant 0 : index
    %c1_22 = arith.constant 1 : index
    %c0_23 = arith.constant 0 : index
    %c0_24 = arith.constant 0 : index
    %22 = vector.load %arg1[%c0_21, %c1_22, %c0_23, %c0_24] : memref<2x10x10x128xf32, #tpu.memory_space<vmem>>, vector<2x8x8x128xf32>
    %23 = vector.shape_cast %22 : vector<2x8x8x128xf32> to vector<128x128xf32>
    %24 = arith.truncf %23 : vector<128x128xf32> to vector<128x128xbf16>
    %c3 = arith.constant 3 : index
    %c0_25 = arith.constant 0 : index
    %c0_26 = arith.constant 0 : index
    %25 = vector.load %arg2[%c3, %c0_25, %c0_26] : memref<9x128x128xbf16, #tpu.memory_space<vmem>>, vector<1x128x128xbf16>
    %26 = vector.shape_cast %25 : vector<1x128x128xbf16> to vector<128x128xbf16>
    %cst_27 = arith.constant dense<0.000000e+00> : vector<128x128xf32>
    %27 = tpu.matmul %24, %26, %cst_27 {dimension_numbers = #tpu.dot_dimension_numbers<[1], [0], [0], [1], [0, 0, 1, 1], [], []>} : vector<128x128xbf16>, vector<128x128xbf16>, vector<128x128xf32> -> vector<128x128xf32>
    %28 = arith.addf %21, %27 : vector<128x128xf32>
    %c0_28 = arith.constant 0 : index
    %c1_29 = arith.constant 1 : index
    %c1_30 = arith.constant 1 : index
    %c0_31 = arith.constant 0 : index
    %29 = vector.load %arg1[%c0_28, %c1_29, %c1_30, %c0_31] : memref<2x10x10x128xf32, #tpu.memory_space<vmem>>, vector<2x8x8x128xf32>
    %30 = vector.shape_cast %29 : vector<2x8x8x128xf32> to vector<128x128xf32>
    %31 = arith.truncf %30 : vector<128x128xf32> to vector<128x128xbf16>
    %c4 = arith.constant 4 : index
    %c0_32 = arith.constant 0 : index
    %c0_33 = arith.constant 0 : index
    %32 = vector.load %arg2[%c4, %c0_32, %c0_33] : memref<9x128x128xbf16, #tpu.memory_space<vmem>>, vector<1x128x128xbf16>
    %33 = vector.shape_cast %32 : vector<1x128x128xbf16> to vector<128x128xbf16>
    %cst_34 = arith.constant dense<0.000000e+00> : vector<128x128xf32>
    %34 = tpu.matmul %31, %33, %cst_34 {dimension_numbers = #tpu.dot_dimension_numbers<[1], [0], [0], [1], [0, 0, 1, 1], [], []>} : vector<128x128xbf16>, vector<128x128xbf16>, vector<128x128xf32> -> vector<128x128xf32>
    %35 = arith.addf %28, %34 : vector<128x128xf32>
    %c0_35 = arith.constant 0 : index
    %c1_36 = arith.constant 1 : index
    %c2_37 = arith.constant 2 : index
    %c0_38 = arith.constant 0 : index
    %36 = vector.load %arg1[%c0_35, %c1_36, %c2_37, %c0_38] : memref<2x10x10x128xf32, #tpu.memory_space<vmem>>, vector<2x8x8x128xf32>
    %37 = vector.shape_cast %36 : vector<2x8x8x128xf32> to vector<128x128xf32>
    %38 = arith.truncf %37 : vector<128x128xf32> to vector<128x128xbf16>
    %c5 = arith.constant 5 : index
    %c0_39 = arith.constant 0 : index
    %c0_40 = arith.constant 0 : index
    %39 = vector.load %arg2[%c5, %c0_39, %c0_40] : memref<9x128x128xbf16, #tpu.memory_space<vmem>>, vector<1x128x128xbf16>
    %40 = vector.shape_cast %39 : vector<1x128x128xbf16> to vector<128x128xbf16>
    %cst_41 = arith.constant dense<0.000000e+00> : vector<128x128xf32>
    %41 = tpu.matmul %38, %40, %cst_41 {dimension_numbers = #tpu.dot_dimension_numbers<[1], [0], [0], [1], [0, 0, 1, 1], [], []>} : vector<128x128xbf16>, vector<128x128xbf16>, vector<128x128xf32> -> vector<128x128xf32>
    %42 = arith.addf %35, %41 : vector<128x128xf32>
    %c0_42 = arith.constant 0 : index
    %c2_43 = arith.constant 2 : index
    %c0_44 = arith.constant 0 : index
    %c0_45 = arith.constant 0 : index
    %43 = vector.load %arg1[%c0_42, %c2_43, %c0_44, %c0_45] : memref<2x10x10x128xf32, #tpu.memory_space<vmem>>, vector<2x8x8x128xf32>
    %44 = vector.shape_cast %43 : vector<2x8x8x128xf32> to vector<128x128xf32>
    %45 = arith.truncf %44 : vector<128x128xf32> to vector<128x128xbf16>
    %c6 = arith.constant 6 : index
    %c0_46 = arith.constant 0 : index
    %c0_47 = arith.constant 0 : index
    %46 = vector.load %arg2[%c6, %c0_46, %c0_47] : memref<9x128x128xbf16, #tpu.memory_space<vmem>>, vector<1x128x128xbf16>
    %47 = vector.shape_cast %46 : vector<1x128x128xbf16> to vector<128x128xbf16>
    %cst_48 = arith.constant dense<0.000000e+00> : vector<128x128xf32>
    %48 = tpu.matmul %45, %47, %cst_48 {dimension_numbers = #tpu.dot_dimension_numbers<[1], [0], [0], [1], [0, 0, 1, 1], [], []>} : vector<128x128xbf16>, vector<128x128xbf16>, vector<128x128xf32> -> vector<128x128xf32>
    %49 = arith.addf %42, %48 : vector<128x128xf32>
    %c0_49 = arith.constant 0 : index
    %c2_50 = arith.constant 2 : index
    %c1_51 = arith.constant 1 : index
    %c0_52 = arith.constant 0 : index
    %50 = vector.load %arg1[%c0_49, %c2_50, %c1_51, %c0_52] : memref<2x10x10x128xf32, #tpu.memory_space<vmem>>, vector<2x8x8x128xf32>
    %51 = vector.shape_cast %50 : vector<2x8x8x128xf32> to vector<128x128xf32>
    %52 = arith.truncf %51 : vector<128x128xf32> to vector<128x128xbf16>
    %c7 = arith.constant 7 : index
    %c0_53 = arith.constant 0 : index
    %c0_54 = arith.constant 0 : index
    %53 = vector.load %arg2[%c7, %c0_53, %c0_54] : memref<9x128x128xbf16, #tpu.memory_space<vmem>>, vector<1x128x128xbf16>
    %54 = vector.shape_cast %53 : vector<1x128x128xbf16> to vector<128x128xbf16>
    %cst_55 = arith.constant dense<0.000000e+00> : vector<128x128xf32>
    %55 = tpu.matmul %52, %54, %cst_55 {dimension_numbers = #tpu.dot_dimension_numbers<[1], [0], [0], [1], [0, 0, 1, 1], [], []>} : vector<128x128xbf16>, vector<128x128xbf16>, vector<128x128xf32> -> vector<128x128xf32>
    %56 = arith.addf %49, %55 : vector<128x128xf32>
    %c0_56 = arith.constant 0 : index
    %c2_57 = arith.constant 2 : index
    %c2_58 = arith.constant 2 : index
    %c0_59 = arith.constant 0 : index
    %57 = vector.load %arg1[%c0_56, %c2_57, %c2_58, %c0_59] : memref<2x10x10x128xf32, #tpu.memory_space<vmem>>, vector<2x8x8x128xf32>
    %58 = vector.shape_cast %57 : vector<2x8x8x128xf32> to vector<128x128xf32>
    %59 = arith.truncf %58 : vector<128x128xf32> to vector<128x128xbf16>
    %c8 = arith.constant 8 : index
    %c0_60 = arith.constant 0 : index
    %c0_61 = arith.constant 0 : index
    %60 = vector.load %arg2[%c8, %c0_60, %c0_61] : memref<9x128x128xbf16, #tpu.memory_space<vmem>>, vector<1x128x128xbf16>
    %61 = vector.shape_cast %60 : vector<1x128x128xbf16> to vector<128x128xbf16>
    %cst_62 = arith.constant dense<0.000000e+00> : vector<128x128xf32>
    %62 = tpu.matmul %59, %61, %cst_62 {dimension_numbers = #tpu.dot_dimension_numbers<[1], [0], [0], [1], [0, 0, 1, 1], [], []>} : vector<128x128xbf16>, vector<128x128xbf16>, vector<128x128xf32> -> vector<128x128xf32>
    %63 = arith.addf %56, %62 : vector<128x128xf32>
    %c0_63 = arith.constant 0 : index
    %c0_64 = arith.constant 0 : index
    %64 = vector.load %arg3[%c0_63, %c0_64] : memref<1x128xf32, #tpu.memory_space<vmem>>, vector<1x128xf32>
    %65 = vector.broadcast %64 : vector<1x128xf32> to vector<128x128xf32>
    %66 = arith.mulf %63, %65 : vector<128x128xf32>
    %c0_65 = arith.constant 0 : index
    %c0_66 = arith.constant 0 : index
    %67 = vector.load %arg4[%c0_65, %c0_66] : memref<1x128xf32, #tpu.memory_space<vmem>>, vector<1x128xf32>
    %68 = vector.broadcast %67 : vector<1x128xf32> to vector<128x128xf32>
    %69 = arith.addf %66, %68 : vector<128x128xf32>
    %cst_67 = arith.constant 0.000000e+00 : f32
    %cst_68 = arith.constant 6.000000e+00 : f32
    %70 = vector.broadcast %cst_67 : f32 to vector<128x128xf32>
    %71 = arith.maximumf %70, %69 : vector<128x128xf32>
    %72 = vector.broadcast %cst_68 : f32 to vector<128x128xf32>
    %73 = arith.minimumf %72, %71 : vector<128x128xf32>
    %74 = vector.shape_cast %73 : vector<128x128xf32> to vector<2x64x128xf32>
    %cst_69 = arith.constant dense<0.000000e+00> : vector<2x128xf32>
    %75 = vector.multi_reduction <add>, %74, %cst_69 [1] : vector<2x64x128xf32> to vector<2x128xf32>
    %cst_70 = arith.constant 1.562500e-02 : f32
    %76 = vector.broadcast %cst_70 : f32 to vector<2x128xf32>
    %77 = arith.mulf %75, %76 : vector<2x128xf32>
    %78 = arith.truncf %77 : vector<2x128xf32> to vector<2x128xbf16>
    %c0_71 = arith.constant 0 : index
    %c0_72 = arith.constant 0 : index
    %79 = vector.load %arg5[%c0_71, %c0_72] : memref<128x128xbf16, #tpu.memory_space<vmem>>, vector<128x128xbf16>
    %cst_73 = arith.constant dense<0.000000e+00> : vector<2x128xf32>
    %80 = tpu.matmul %78, %79, %cst_73 {dimension_numbers = #tpu.dot_dimension_numbers<[1], [0], [0], [1], [0, 0, 1, 1], [], []>} : vector<2x128xbf16>, vector<128x128xbf16>, vector<2x128xf32> -> vector<2x128xf32>
    %c0_74 = arith.constant 0 : index
    %c0_75 = arith.constant 0 : index
    %81 = vector.load %arg6[%c0_74, %c0_75] : memref<1x128xf32, #tpu.memory_space<vmem>>, vector<1x128xf32>
    %82 = vector.broadcast %81 : vector<1x128xf32> to vector<2x128xf32>
    %83 = arith.mulf %80, %82 : vector<2x128xf32>
    %c0_76 = arith.constant 0 : index
    %c0_77 = arith.constant 0 : index
    %84 = vector.load %arg7[%c0_76, %c0_77] : memref<1x128xf32, #tpu.memory_space<vmem>>, vector<1x128xf32>
    %85 = vector.broadcast %84 : vector<1x128xf32> to vector<2x128xf32>
    %86 = arith.addf %83, %85 : vector<2x128xf32>
    %cst_78 = arith.constant 0.000000e+00 : f32
    %87 = vector.broadcast %cst_78 : f32 to vector<2x128xf32>
    %88 = arith.maximumf %86, %87 : vector<2x128xf32>
    %89 = arith.truncf %88 : vector<2x128xf32> to vector<2x128xbf16>
    %c0_79 = arith.constant 0 : index
    %c0_80 = arith.constant 0 : index
    %90 = vector.load %arg8[%c0_79, %c0_80] : memref<128x128xbf16, #tpu.memory_space<vmem>>, vector<128x128xbf16>
    %cst_81 = arith.constant dense<0.000000e+00> : vector<2x128xf32>
    %91 = tpu.matmul %89, %90, %cst_81 {dimension_numbers = #tpu.dot_dimension_numbers<[1], [0], [0], [1], [0, 0, 1, 1], [], []>} : vector<2x128xbf16>, vector<128x128xbf16>, vector<2x128xf32> -> vector<2x128xf32>
    %c0_82 = arith.constant 0 : index
    %c0_83 = arith.constant 0 : index
    %92 = vector.load %arg9[%c0_82, %c0_83] : memref<1x128xf32, #tpu.memory_space<vmem>>, vector<1x128xf32>
    %93 = vector.broadcast %92 : vector<1x128xf32> to vector<2x128xf32>
    %94 = arith.mulf %91, %93 : vector<2x128xf32>
    %c0_84 = arith.constant 0 : index
    %c0_85 = arith.constant 0 : index
    %95 = vector.load %arg10[%c0_84, %c0_85] : memref<1x128xf32, #tpu.memory_space<vmem>>, vector<1x128xf32>
    %96 = vector.broadcast %95 : vector<1x128xf32> to vector<2x128xf32>
    %97 = arith.addf %94, %96 : vector<2x128xf32>
    %cst_86 = arith.constant 0.000000e+00 : f32
    %98 = vector.broadcast %cst_86 : f32 to vector<2x128xf32>
    %99 = arith.maximumf %97, %98 : vector<2x128xf32>
    %100 = arith.truncf %99 : vector<2x128xf32> to vector<2x128xbf16>
    %c0_87 = arith.constant 0 : index
    %c0_88 = arith.constant 0 : index
    %101 = vector.load %arg11[%c0_87, %c0_88] : memref<128x128xbf16, #tpu.memory_space<vmem>>, vector<128x128xbf16>
    %cst_89 = arith.constant dense<0.000000e+00> : vector<2x128xf32>
    %102 = tpu.matmul %100, %101, %cst_89 {dimension_numbers = #tpu.dot_dimension_numbers<[1], [0], [0], [1], [0, 0, 1, 1], [], []>} : vector<2x128xbf16>, vector<128x128xbf16>, vector<2x128xf32> -> vector<2x128xf32>
    %c0_90 = arith.constant 0 : index
    %c0_91 = arith.constant 0 : index
    %103 = vector.load %arg12[%c0_90, %c0_91] : memref<1x128xf32, #tpu.memory_space<vmem>>, vector<1x128xf32>
    %104 = vector.broadcast %103 : vector<1x128xf32> to vector<2x128xf32>
    %105 = arith.addf %102, %104 : vector<2x128xf32>
    %cst_92 = arith.constant dense<0xFF800000> : vector<2xf32>
    %106 = vector.multi_reduction <maximumf>, %105, %cst_92 [1] : vector<2x128xf32> to vector<2xf32>
    %107 = vector.shape_cast %106 : vector<2xf32> to vector<2x1xf32>
    %108 = vector.broadcast %107 : vector<2x1xf32> to vector<2x128xf32>
    %109 = arith.subf %105, %108 : vector<2x128xf32>
    %110 = math.exp %109 : vector<2x128xf32>
    %cst_93 = arith.constant dense<0.000000e+00> : vector<2xf32>
    %111 = vector.multi_reduction <add>, %110, %cst_93 [1] : vector<2x128xf32> to vector<2xf32>
    %112 = vector.shape_cast %111 : vector<2xf32> to vector<2x1xf32>
    %113 = vector.broadcast %112 : vector<2x1xf32> to vector<2x128xf32>
    %114 = arith.divf %110, %113 : vector<2x128xf32>
    %115 = arith.truncf %114 : vector<2x128xf32> to vector<2x128xbf16>
    %c0_94 = arith.constant 0 : index
    %c0_95 = arith.constant 0 : index
    %c0_96 = arith.constant 0 : index
    %116 = vector.load %arg13[%c0_94, %c0_95, %c0_96] : memref<1x2x128xbf16, #tpu.memory_space<vmem>>, vector<1x2x128xbf16>
    %117 = vector.shape_cast %116 : vector<1x2x128xbf16> to vector<2x128xbf16>
    %118 = vector.shape_cast %115 : vector<2x128xbf16> to vector<1x2x128xbf16>
    tpu.vector_store %arg13[%c0_94, %c0_95, %c0_96], %118 {strides = array<i32>} : memref<1x2x128xbf16, #tpu.memory_space<vmem>>, vector<1x2x128xbf16>,
    return
  }
  func.func @transform_0(%arg0: i32) -> (i32, i32, i32, i32) {
    %c0_i32 = arith.constant 0 : i32
    %c0_i32_0 = arith.constant 0 : i32
    %c0_i32_1 = arith.constant 0 : i32
    %c0_i32_2 = arith.constant 0 : i32
    return %arg0, %c0_i32, %c0_i32_0, %c0_i32_1 : i32, i32, i32, i32
  }
  func.func @transform_1(%arg0: i32) -> (i32, i32, i32) {
    %c0_i32 = arith.constant 0 : i32
    %c0_i32_0 = arith.constant 0 : i32
    %c0_i32_1 = arith.constant 0 : i32
    %c0_i32_2 = arith.constant 0 : i32
    return %c0_i32, %c0_i32_0, %c0_i32_1 : i32, i32, i32
  }
  func.func @transform_2(%arg0: i32) -> (i32, i32) {
    %c0_i32 = arith.constant 0 : i32
    %c0_i32_0 = arith.constant 0 : i32
    %c0_i32_1 = arith.constant 0 : i32
    return %c0_i32, %c0_i32_0 : i32, i32
  }
  func.func @transform_3(%arg0: i32) -> (i32, i32) {
    %c0_i32 = arith.constant 0 : i32
    %c0_i32_0 = arith.constant 0 : i32
    %c0_i32_1 = arith.constant 0 : i32
    return %c0_i32, %c0_i32_0 : i32, i32
  }
  func.func @transform_4(%arg0: i32) -> (i32, i32) {
    %c0_i32 = arith.constant 0 : i32
    %c0_i32_0 = arith.constant 0 : i32
    %c0_i32_1 = arith.constant 0 : i32
    return %c0_i32, %c0_i32_0 : i32, i32
  }
  func.func @transform_5(%arg0: i32) -> (i32, i32) {
    %c0_i32 = arith.constant 0 : i32
    %c0_i32_0 = arith.constant 0 : i32
    %c0_i32_1 = arith.constant 0 : i32
    return %c0_i32, %c0_i32_0 : i32, i32
  }
  func.func @transform_6(%arg0: i32) -> (i32, i32) {
    %c0_i32 = arith.constant 0 : i32
    %c0_i32_0 = arith.constant 0 : i32
    %c0_i32_1 = arith.constant 0 : i32
    return %c0_i32, %c0_i32_0 : i32, i32
  }
  func.func @transform_7(%arg0: i32) -> (i32, i32) {
    %c0_i32 = arith.constant 0 : i32
    %c0_i32_0 = arith.constant 0 : i32
    %c0_i32_1 = arith.constant 0 : i32
    return %c0_i32, %c0_i32_0 : i32, i32
  }
  func.func @transform_8(%arg0: i32) -> (i32, i32) {
    %c0_i32 = arith.constant 0 : i32
    %c0_i32_0 = arith.constant 0 : i32
    %c0_i32_1 = arith.constant 0 : i32
    return %c0_i32, %c0_i32_0 : i32, i32
  }
  func.func @transform_9(%arg0: i32) -> (i32, i32) {
    %c0_i32 = arith.constant 0 : i32
    %c0_i32_0 = arith.constant 0 : i32
    %c0_i32_1 = arith.constant 0 : i32
    return %c0_i32, %c0_i32_0 : i32, i32
  }
  func.func @transform_10(%arg0: i32) -> (i32, i32) {
    %c0_i32 = arith.constant 0 : i32
    %c0_i32_0 = arith.constant 0 : i32
    %c0_i32_1 = arith.constant 0 : i32
    return %c0_i32, %c0_i32_0 : i32, i32
  }
  func.func @transform_11(%arg0: i32) -> (i32, i32) {
    %c0_i32 = arith.constant 0 : i32
    %c0_i32_0 = arith.constant 0 : i32
    %c0_i32_1 = arith.constant 0 : i32
    return %c0_i32, %c0_i32_0 : i32, i32
  }
  func.func @transform_12(%arg0: i32) -> (i32, i32, i32) {
    %c0_i32 = arith.constant 0 : i32
    %c0_i32_0 = arith.constant 0 : i32
    %c0_i32_1 = arith.constant 0 : i32
    return %arg0, %c0_i32, %c0_i32_0 : i32, i32, i32
  }
}

</mosaic_0001>

<llo_original>
// kernel: tpu_custom_call.1
$region0: #{tpu_custom_call.1}
  #allocation0 [shape = 'u32[]', space=smem, size = 0x4, offset = 0x4, fixed_abs, tag = 'smem constant byte address 0x4 - core index']
  #allocation1 [shape = 'u32[144,128]{1,0:T(1,128)}', space=vmem, size = 0x12000, scoped, tag = 'internal scratch']
  %s0 = inlined_call_operand.vmem [shape: f32[4,10,10,128], index: 0, kind: input, shape index: {}]
  %s1 = inlined_call_operand.vmem [shape: bf16[9,128,128], index: 1, kind: input, shape index: {}]
  %s2 = inlined_call_operand.vmem [shape: f32[1,128], index: 2, kind: input, shape index: {}]
  %s3 = inlined_call_operand.vmem [shape: f32[1,128], index: 3, kind: input, shape index: {}]
  %s4 = inlined_call_operand.vmem [shape: bf16[128,128], index: 4, kind: input, shape index: {}]
  %s5 = inlined_call_operand.vmem [shape: f32[1,128], index: 5, kind: input, shape index: {}]
  %s6 = inlined_call_operand.vmem [shape: f32[1,128], index: 6, kind: input, shape index: {}]
  %s7 = inlined_call_operand.vmem [shape: bf16[128,128], index: 7, kind: input, shape index: {}]
  %s8 = inlined_call_operand.vmem [shape: f32[1,128], index: 8, kind: input, shape index: {}]
  %s9 = inlined_call_operand.vmem [shape: f32[1,128], index: 9, kind: input, shape index: {}]
  %s10 = inlined_call_operand.vmem [shape: bf16[128,128], index: 10, kind: input, shape index: {}]
  %s11 = inlined_call_operand.vmem [shape: f32[1,128], index: 11, kind: input, shape index: {}]
  %s12 = inlined_call_operand.hbm [shape: bf16[2,2,128], index: 12, kind: output, shape index: {}]
  %s13 = sld [smem:[#allocation0]]
  $region81: #{tpu_custom_call.1} parent=0
    _
  %s15 = ssub.s32 1, %s13
  %s16 = scalar_select 0, %s15, %s13
  $region1: #{tpu_custom_call.1} parent=0
    #allocation2 [shape = 'u8[1024]{0}', space=vmem, size = 0x400, scoped, tag = 'output window, operand 0']
    #allocation3 [shape = 's32[2]{0}', space=sflag, size = 0x8, scoped, tag = 'scoped memory for tpu_custom_call.1']
    %17 = vsyncpa [#allocation3], 0
    %s18 = scalar_lea.sflag [#allocation3], 1
    %19 = vsyncpa %s18, 0
    loop: start=0, step=1, limit=4
    $region2: #{tpu_custom_call.1} parent=1 // loop_pre_header
      _
    $region3: #{tpu_custom_call.1} parent=1 // loop_header
      %s21 = sphi 0, %s25
      %p22 = scmp.ge.s32.totalorder %s21, 4
      %s31 = sphi 0, %s33
      %s34 = sphi 0, %s31
      %s35 = sphi 0, %s34
      %s51 = sphi 0, %s35
      %s55 = sphi 0, %s55
      %s57 = sphi 0, %s55
      %s58 = sphi 0, %s57
      %s72 = sphi 0, %s58
      %s76 = sphi 0, %s76
      %s78 = sphi 0, %s76
      %s79 = sphi 0, %s78
      %s93 = sphi 0, %s79
      %s97 = sphi 0, %s97
      %s99 = sphi 0, %s97
      %s100 = sphi 0, %s99
      %s114 = sphi 0, %s100
      %s118 = sphi 0, %s118
      %s120 = sphi 0, %s118
      %s121 = sphi 0, %s120
      %s135 = sphi 0, %s121
      %s139 = sphi 0, %s139
      %s141 = sphi 0, %s139
      %s142 = sphi 0, %s141
      %s156 = sphi 0, %s142
      %s160 = sphi 0, %s160
      %s162 = sphi 0, %s160
      %s163 = sphi 0, %s162
      %s177 = sphi 0, %s163
      %s181 = sphi 0, %s181
      %s183 = sphi 0, %s181
      %s184 = sphi 0, %s183
      %s198 = sphi 0, %s184
      %s202 = sphi 0, %s202
      %s204 = sphi 0, %s202
      %s205 = sphi 0, %s204
      %s219 = sphi 0, %s205
      %s223 = sphi 0, %s223
      %s225 = sphi 0, %s223
      %s226 = sphi 0, %s225
      %s240 = sphi 0, %s226
      %s244 = sphi 0, %s244
      %s246 = sphi 0, %s244
      %s247 = sphi 0, %s246
      %s261 = sphi 0, %s247
      %s265 = sphi 0, %s265
      %s267 = sphi 0, %s265
      %s268 = sphi 0, %s267
      %s282 = sphi 0, %s268
      %s288 = sphi 0, %s290
      %s291 = sphi 0, %s288
      %s292 = sphi 0, %s291
      %s308 = sphi 0, %s292
    $region4: #{tpu_custom_call.1} parent=1 // loop_header_branch
      %24 = sbr.rel (%p22) target = $region8
    $region5: #{tpu_custom_call.1} parent=1 // loop_body
      %s26 = ssub.s32 %s21, 1
      %s27 = ssub.s32 %s21, 2
      %s28 = sadd.s32 %s21, 1
      %s29 = ssub.s32 %s21, %s28
      %p30 = scmp.eq.s32.totalorder %s29, 0
      %s32 = sadd.s32 %s31, 1
      %s33 = scalar_select %p30, %s31, %s32
      %p36 = pneg %p30
      %p37 = scmp.eq.s32.totalorder %s21, 1
      %p38 = por %p36, %p37
      %p39 = scmp.ne.s32.totalorder %s31, %s34
      %p40 = scmp.eq.s32.totalorder %s21, 0
      %p41 = por %p39, %p40
      %p42 = scmp.ne.s32.totalorder %s31, %s34
      %p43 = scmp.eq.s32.totalorder %s26, 1
      %p44 = por %p42, %p43
      %p45 = scmp.ne.s32.totalorder %s34, %s35
      %p46 = scmp.eq.s32.totalorder %s26, 0
      %p47 = por %p45, %p46
      %p48 = scmp.ne.s32.totalorder %s34, %s35
      %p49 = scmp.eq.s32.totalorder %s27, 1
      %p50 = por %p48, %p49
      %p52 = scmp.ne.s32.totalorder %s35, %s51
      %p53 = scmp.eq.s32.totalorder %s27, 0
      %p54 = por %p52, %p53
      %s56 = sadd.s32 %s55, 1
      %p59 = scmp.eq.s32.totalorder %s21, 1
      %p60 = scmp.ne.s32.totalorder %s55, %s57
      %p61 = scmp.eq.s32.totalorder %s21, 0
      %p62 = por %p60, %p61
      %p63 = scmp.ne.s32.totalorder %s55, %s57
      %p64 = scmp.eq.s32.totalorder %s26, 1
      %p65 = por %p63, %p64
      %p66 = scmp.ne.s32.totalorder %s57, %s58
      %p67 = scmp.eq.s32.totalorder %s26, 0
      %p68 = por %p66, %p67
      %p69 = scmp.ne.s32.totalorder %s57, %s58
      %p70 = scmp.eq.s32.totalorder %s27, 1
      %p71 = por %p69, %p70
      %p73 = scmp.ne.s32.totalorder %s58, %s72
      %p74 = scmp.eq.s32.totalorder %s27, 0
      %p75 = por %p73, %p74
      %s77 = sadd.s32 %s76, 1
      %p80 = scmp.eq.s32.totalorder %s21, 1
      %p81 = scmp.ne.s32.totalorder %s76, %s78
      %p82 = scmp.eq.s32.totalorder %s21, 0
      %p83 = por %p81, %p82
      %p84 = scmp.ne.s32.totalorder %s76, %s78
      %p85 = scmp.eq.s32.totalorder %s26, 1
      %p86 = por %p84, %p85
      %p87 = scmp.ne.s32.totalorder %s78, %s79
      %p88 = scmp.eq.s32.totalorder %s26, 0
      %p89 = por %p87, %p88
      %p90 = scmp.ne.s32.totalorder %s78, %s79
      %p91 = scmp.eq.s32.totalorder %s27, 1
      %p92 = por %p90, %p91
      %p94 = scmp.ne.s32.totalorder %s79, %s93
      %p95 = scmp.eq.s32.totalorder %s27, 0
      %p96 = por %p94, %p95
      %s98 = sadd.s32 %s97, 1
      %p101 = scmp.eq.s32.totalorder %s21, 1
      %p102 = scmp.ne.s32.totalorder %s97, %s99
      %p103 = scmp.eq.s32.totalorder %s21, 0
      %p104 = por %p102, %p103
      %p105 = scmp.ne.s32.totalorder %s97, %s99
      %p106 = scmp.eq.s32.totalorder %s26, 1
      %p107 = por %p105, %p106
      %p108 = scmp.ne.s32.totalorder %s99, %s100
      %p109 = scmp.eq.s32.totalorder %s26, 0
      %p110 = por %p108, %p109
      %p111 = scmp.ne.s32.totalorder %s99, %s100
      %p112 = scmp.eq.s32.totalorder %s27, 1
      %p113 = por %p111, %p112
      %p115 = scmp.ne.s32.totalorder %s100, %s114
      %p116 = scmp.eq.s32.totalorder %s27, 0
      %p117 = por %p115, %p116
      %s119 = sadd.s32 %s118, 1
      %p122 = scmp.eq.s32.totalorder %s21, 1
      %p123 = scmp.ne.s32.totalorder %s118, %s120
      %p124 = scmp.eq.s32.totalorder %s21, 0
      %p125 = por %p123, %p124
      %p126 = scmp.ne.s32.totalorder %s118, %s120
      %p127 = scmp.eq.s32.totalorder %s26, 1
      %p128 = por %p126, %p127
      %p129 = scmp.ne.s32.totalorder %s120, %s121
      %p130 = scmp.eq.s32.totalorder %s26, 0
      %p131 = por %p129, %p130
      %p132 = scmp.ne.s32.totalorder %s120, %s121
      %p133 = scmp.eq.s32.totalorder %s27, 1
      %p134 = por %p132, %p133
      %p136 = scmp.ne.s32.totalorder %s121, %s135
      %p137 = scmp.eq.s32.totalorder %s27, 0
      %p138 = por %p136, %p137
      %s140 = sadd.s32 %s139, 1
      %p143 = scmp.eq.s32.totalorder %s21, 1
      %p144 = scmp.ne.s32.totalorder %s139, %s141
      %p145 = scmp.eq.s32.totalorder %s21, 0
      %p146 = por %p144, %p145
      %p147 = scmp.ne.s32.totalorder %s139, %s141
      %p148 = scmp.eq.s32.totalorder %s26, 1
      %p149 = por %p147, %p148
      %p150 = scmp.ne.s32.totalorder %s141, %s142
      %p151 = scmp.eq.s32.totalorder %s26, 0
      %p152 = por %p150, %p151
      %p153 = scmp.ne.s32.totalorder %s141, %s142
      %p154 = scmp.eq.s32.totalorder %s27, 1
      %p155 = por %p153, %p154
      %p157 = scmp.ne.s32.totalorder %s142, %s156
      %p158 = scmp.eq.s32.totalorder %s27, 0
      %p159 = por %p157, %p158
      %s161 = sadd.s32 %s160, 1
      %p164 = scmp.eq.s32.totalorder %s21, 1
      %p165 = scmp.ne.s32.totalorder %s160, %s162
      %p166 = scmp.eq.s32.totalorder %s21, 0
      %p167 = por %p165, %p166
      %p168 = scmp.ne.s32.totalorder %s160, %s162
      %p169 = scmp.eq.s32.totalorder %s26, 1
      %p170 = por %p168, %p169
      %p171 = scmp.ne.s32.totalorder %s162, %s163
      %p172 = scmp.eq.s32.totalorder %s26, 0
      %p173 = por %p171, %p172
      %p174 = scmp.ne.s32.totalorder %s162, %s163
      %p175 = scmp.eq.s32.totalorder %s27, 1
      %p176 = por %p174, %p175
      %p178 = scmp.ne.s32.totalorder %s163, %s177
      %p179 = scmp.eq.s32.totalorder %s27, 0
      %p180 = por %p178, %p179
      %s182 = sadd.s32 %s181, 1
      %p185 = scmp.eq.s32.totalorder %s21, 1
      %p186 = scmp.ne.s32.totalorder %s181, %s183
      %p187 = scmp.eq.s32.totalorder %s21, 0
      %p188 = por %p186, %p187
      %p189 = scmp.ne.s32.totalorder %s181, %s183
      %p190 = scmp.eq.s32.totalorder %s26, 1
      %p191 = por %p189, %p190
      %p192 = scmp.ne.s32.totalorder %s183, %s184
      %p193 = scmp.eq.s32.totalorder %s26, 0
      %p194 = por %p192, %p193
      %p195 = scmp.ne.s32.totalorder %s183, %s184
      %p196 = scmp.eq.s32.totalorder %s27, 1
      %p197 = por %p195, %p196
      %p199 = scmp.ne.s32.totalorder %s184, %s198
      %p200 = scmp.eq.s32.totalorder %s27, 0
      %p201 = por %p199, %p200
      %s203 = sadd.s32 %s202, 1
      %p206 = scmp.eq.s32.totalorder %s21, 1
      %p207 = scmp.ne.s32.totalorder %s202, %s204
      %p208 = scmp.eq.s32.totalorder %s21, 0
      %p209 = por %p207, %p208
      %p210 = scmp.ne.s32.totalorder %s202, %s204
      %p211 = scmp.eq.s32.totalorder %s26, 1
      %p212 = por %p210, %p211
      %p213 = scmp.ne.s32.totalorder %s204, %s205
      %p214 = scmp.eq.s32.totalorder %s26, 0
      %p215 = por %p213, %p214
      %p216 = scmp.ne.s32.totalorder %s204, %s205
      %p217 = scmp.eq.s32.totalorder %s27, 1
      %p218 = por %p216, %p217
      %p220 = scmp.ne.s32.totalorder %s205, %s219
      %p221 = scmp.eq.s32.totalorder %s27, 0
      %p222 = por %p220, %p221
      %s224 = sadd.s32 %s223, 1
      %p227 = scmp.eq.s32.totalorder %s21, 1
      %p228 = scmp.ne.s32.totalorder %s223, %s225
      %p229 = scmp.eq.s32.totalorder %s21, 0
      %p230 = por %p228, %p229
      %p231 = scmp.ne.s32.totalorder %s223, %s225
      %p232 = scmp.eq.s32.totalorder %s26, 1
      %p233 = por %p231, %p232
      %p234 = scmp.ne.s32.totalorder %s225, %s226
      %p235 = scmp.eq.s32.totalorder %s26, 0
      %p236 = por %p234, %p235
      %p237 = scmp.ne.s32.totalorder %s225, %s226
      %p238 = scmp.eq.s32.totalorder %s27, 1
      %p239 = por %p237, %p238
      %p241 = scmp.ne.s32.totalorder %s226, %s240
      %p242 = scmp.eq.s32.totalorder %s27, 0
      %p243 = por %p241, %p242
      %s245 = sadd.s32 %s244, 1
      %p248 = scmp.eq.s32.totalorder %s21, 1
      %p249 = scmp.ne.s32.totalorder %s244, %s246
      %p250 = scmp.eq.s32.totalorder %s21, 0
      %p251 = por %p249, %p250
      %p252 = scmp.ne.s32.totalorder %s244, %s246
      %p253 = scmp.eq.s32.totalorder %s26, 1
      %p254 = por %p252, %p253
      %p255 = scmp.ne.s32.totalorder %s246, %s247
      %p256 = scmp.eq.s32.totalorder %s26, 0
      %p257 = por %p255, %p256
      %p258 = scmp.ne.s32.totalorder %s246, %s247
      %p259 = scmp.eq.s32.totalorder %s27, 1
      %p260 = por %p258, %p259
      %p262 = scmp.ne.s32.totalorder %s247, %s261
      %p263 = scmp.eq.s32.totalorder %s27, 0
      %p264 = por %p262, %p263
      %s266 = sadd.s32 %s265, 1
      %p269 = scmp.eq.s32.totalorder %s21, 1
      %p270 = scmp.ne.s32.totalorder %s265, %s267
      %p271 = scmp.eq.s32.totalorder %s21, 0
      %p272 = por %p270, %p271
      %p273 = scmp.ne.s32.totalorder %s265, %s267
      %p274 = scmp.eq.s32.totalorder %s26, 1
      %p275 = por %p273, %p274
      %p276 = scmp.ne.s32.totalorder %s267, %s268
      %p277 = scmp.eq.s32.totalorder %s26, 0
      %p278 = por %p276, %p277
      %p279 = scmp.ne.s32.totalorder %s267, %s268
      %p280 = scmp.eq.s32.totalorder %s27, 1
      %p281 = por %p279, %p280
      %p283 = scmp.ne.s32.totalorder %s268, %s282
      %p284 = scmp.eq.s32.totalorder %s27, 0
      %p285 = por %p283, %p284
      %s286 = ssub.s32 %s21, %s28
      %p287 = scmp.eq.s32.totalorder %s286, 0
      %s289 = sadd.s32 %s288, 1
      %s290 = scalar_select %p287, %s288, %s289
      %p293 = pneg %p287
      %p294 = scmp.eq.s32.totalorder %s21, 1
      %p295 = por %p293, %p294
      %p296 = scmp.ne.s32.totalorder %s288, %s291
      %p297 = scmp.eq.s32.totalorder %s21, 0
      %p298 = por %p296, %p297
      %p299 = scmp.ne.s32.totalorder %s288, %s291
      %p300 = scmp.eq.s32.totalorder %s26, 1
      %p301 = por %p299, %p300
      %p302 = scmp.ne.s32.totalorder %s291, %s292
      %p303 = scmp.eq.s32.totalorder %s26, 0
      %p304 = por %p302, %p303
      %p305 = scmp.ne.s32.totalorder %s291, %s292
      %p306 = scmp.eq.s32.totalorder %s27, 1
      %p307 = por %p305, %p306
      %p309 = scmp.ne.s32.totalorder %s292, %s308
      %p310 = scmp.eq.s32.totalorder %s27, 0
      %p311 = por %p309, %p310
      %p312 = scmp.le.s32.totalorder 1, %s21
      %p313 = scmp.lt.s32.totalorder %s21, 3
      %p314 = pnand %p312, %p313
      %p315 = pneg %p314
      // Predicated region
      $region9: #{tpu_custom_call.1} parent=5 // pred_check
        _
      $region10: #{tpu_custom_call.1} parent=5 // pred_check_branch
        %317 = sbr.rel (%p314) target = $region12
      $region11: #{tpu_custom_call.1} parent=5 // pred_region
        %s318 = ssub.s32 %s21, 1
        // Predicated region
        $region13: #{tpu_custom_call.1} parent=11 // pred_check
          %p319 = pneg %p68
        $region14: #{tpu_custom_call.1} parent=11 // pred_check_branch
          %321 = sbr.rel (%p319) target = $region16
        $region15: #{tpu_custom_call.1} parent=11 // pred_region
          _
        $region16: #{tpu_custom_call.1} parent=11 // pred_fallthru
          _
        // Predicated region
        $region17: #{tpu_custom_call.1} parent=11 // pred_check
          %p322 = pneg %p89
        $region18: #{tpu_custom_call.1} parent=11 // pred_check_branch
          %324 = sbr.rel (%p322) target = $region20
        $region19: #{tpu_custom_call.1} parent=11 // pred_region
          _
        $region20: #{tpu_custom_call.1} parent=11 // pred_fallthru
          _
        // Predicated region
        $region21: #{tpu_custom_call.1} parent=11 // pred_check
          %p325 = pneg %p110
        $region22: #{tpu_custom_call.1} parent=11 // pred_check_branch
          %327 = sbr.rel (%p325) target = $region24
        $region23: #{tpu_custom_call.1} parent=11 // pred_region
          _
        $region24: #{tpu_custom_call.1} parent=11 // pred_fallthru
          _
        // Predicated region
        $region25: #{tpu_custom_call.1} parent=11 // pred_check
          %p328 = pneg %p131
        $region26: #{tpu_custom_call.1} parent=11 // pred_check_branch
          %330 = sbr.rel (%p328) target = $region28
        $region27: #{tpu_custom_call.1} parent=11 // pred_region
          _
        $region28: #{tpu_custom_call.1} parent=11 // pred_fallthru
          _
        // Predicated region
        $region29: #{tpu_custom_call.1} parent=11 // pred_check
          %p331 = pneg %p152
        $region30: #{tpu_custom_call.1} parent=11 // pred_check_branch
          %333 = sbr.rel (%p331) target = $region32
        $region31: #{tpu_custom_call.1} parent=11 // pred_region
          _
        $region32: #{tpu_custom_call.1} parent=11 // pred_fallthru
          _
        // Predicated region
        $region33: #{tpu_custom_call.1} parent=11 // pred_check
          %p334 = pneg %p173
        $region34: #{tpu_custom_call.1} parent=11 // pred_check_branch
          %336 = sbr.rel (%p334) target = $region36
        $region35: #{tpu_custom_call.1} parent=11 // pred_region
          _
        $region36: #{tpu_custom_call.1} parent=11 // pred_fallthru
          _
        // Predicated region
        $region37: #{tpu_custom_call.1} parent=11 // pred_check
          %p337 = pneg %p194
        $region38: #{tpu_custom_call.1} parent=11 // pred_check_branch
          %339 = sbr.rel (%p337) target = $region40
        $region39: #{tpu_custom_call.1} parent=11 // pred_region
          _
        $region40: #{tpu_custom_call.1} parent=11 // pred_fallthru
          _
        // Predicated region
        $region41: #{tpu_custom_call.1} parent=11 // pred_check
          %p340 = pneg %p215
        $region42: #{tpu_custom_call.1} parent=11 // pred_check_branch
          %342 = sbr.rel (%p340) target = $region44
        $region43: #{tpu_custom_call.1} parent=11 // pred_region
          _
        $region44: #{tpu_custom_call.1} parent=11 // pred_fallthru
          _
        // Predicated region
        $region45: #{tpu_custom_call.1} parent=11 // pred_check
          %p343 = pneg %p236
        $region46: #{tpu_custom_call.1} parent=11 // pred_check_branch
          %345 = sbr.rel (%p343) target = $region48
        $region47: #{tpu_custom_call.1} parent=11 // pred_region
          _
        $region48: #{tpu_custom_call.1} parent=11 // pred_fallthru
          _
        // Predicated region
        $region49: #{tpu_custom_call.1} parent=11 // pred_check
          %p346 = pneg %p257
        $region50: #{tpu_custom_call.1} parent=11 // pred_check_branch
          %348 = sbr.rel (%p346) target = $region52
        $region51: #{tpu_custom_call.1} parent=11 // pred_region
          _
        $region52: #{tpu_custom_call.1} parent=11 // pred_fallthru
          _
        // Predicated region
        $region53: #{tpu_custom_call.1} parent=11 // pred_check
          %p349 = pneg %p278
        $region54: #{tpu_custom_call.1} parent=11 // pred_check_branch
          %351 = sbr.rel (%p349) target = $region56
        $region55: #{tpu_custom_call.1} parent=11 // pred_region
          _
        $region56: #{tpu_custom_call.1} parent=11 // pred_fallthru
          _
      $region12: #{tpu_custom_call.1} parent=5 // pred_fallthru
        _
      %p352 = scmp.lt.s32.totalorder %s21, 2
      // Predicated region
      $region57: #{tpu_custom_call.1} parent=5 // pred_check
        %p353 = pneg %p352
      $region58: #{tpu_custom_call.1} parent=5 // pred_check_branch
        %355 = sbr.rel (%p353) target = $region60
      $region59: #{tpu_custom_call.1} parent=5 // pred_region
        // Predicated region
        $region61: #{tpu_custom_call.1} parent=59 // pred_check
          %p356 = pneg %p41
        $region62: #{tpu_custom_call.1} parent=59 // pred_check_branch
          %358 = sbr.rel (%p356) target = $region64
        $region63: #{tpu_custom_call.1} parent=59 // pred_region
          %s359 = smul.u32 2, %s21
          %p360 = scmp.lt.s32.totalorder %s359, 3
          %s361 = scalar_select %p360, %s359, 3
          %s362 = smul.addr %s361, 20
          %s363 = smul.addr %s362, 8
          %s364 = scalar_lea.vmem %s0, %s363
          %s365 = smul.u32 2, %s21
        $region64: #{tpu_custom_call.1} parent=59 // pred_fallthru
          _
      $region60: #{tpu_custom_call.1} parent=5 // pred_fallthru
        _
      %p366 = scmp.le.s32.totalorder 1, %s21
      %p367 = scmp.lt.s32.totalorder %s21, 3
      %p368 = pnand %p366, %p367
      %p369 = pneg %p368
      // Predicated region
      $region65: #{tpu_custom_call.1} parent=5 // pred_check
        _
      $region66: #{tpu_custom_call.1} parent=5 // pred_check_branch
        %371 = sbr.rel (%p368) target = $region68
      $region67: #{tpu_custom_call.1} parent=5 // pred_region
        %s372 = ssub.s32 %s21, 1
        %s373 = smul.u32 2, %s26
        %p374 = scmp.lt.s32.totalorder %s373, 3
        %s375 = scalar_select %p374, %s373, 3
        %s376 = smul.addr %s375, 20
        %s377 = smul.addr %s376, 8
        %s378 = scalar_lea.vmem %s0, %s377
        %p379 = pneg %p47
        %p380 = pneg %p44
        %p381 = pneg %p68
        %p382 = pneg %p65
        %p383 = pneg %p89
        %p384 = pneg %p86
        %p385 = pneg %p110
        %p386 = pneg %p107
        %p387 = pneg %p131
        %p388 = pneg %p128
        %p389 = pneg %p152
        %p390 = pneg %p149
        %p391 = pneg %p173
        %p392 = pneg %p170
        %p393 = pneg %p194
        %p394 = pneg %p191
        %p395 = pneg %p215
        %p396 = pneg %p212
        %p397 = pneg %p236
        %p398 = pneg %p233
        %p399 = pneg %p257
        %p400 = pneg %p254
        %p401 = pneg %p278
        %p402 = pneg %p275
        %p403 = pneg %p304
        %p404 = pneg %p301
        %s405 = sand.u32 %s291, 1
        %s406 = scalar_lea.sflag [#allocation3], %s405
        %s407 = sand.u32 %s291, 1
        %s408 = scalar_lea.vmem [#allocation2], %s407
        %s409 = smul.u32 2, %s26
        %p410 = scmp.lt.s32.totalorder %s409, 3
        %s411 = scalar_select %p410, %s409, 3
        %s412 = smul.addr %s411, 20
        %s413 = smul.addr %s412, 8
        %s414 = scalar_lea.vmem %s0, %s413
        %s415 = smul.u32 2, %s26
        %v417 = vld [vmem:[%s414] sm:$0xff]
        %v418 = vld [vmem:[%s414 + $0x10] sm:$0xff]
        %v419 = vld [vmem:[%s414 + $0x20] sm:$0xff]
        %v420 = vld [vmem:[%s414 + $0x30] sm:$0xff]
        %v421 = vld [vmem:[%s414 + $0x40] sm:$0xff]
        %v422 = vld [vmem:[%s414 + $0x50] sm:$0xff]
        %v423 = vld [vmem:[%s414 + $0x60] sm:$0xff]
        %v424 = vld [vmem:[%s414 + $0x70] sm:$0xff]
        %v425 = vld [vmem:[%s414 + $0xa0] sm:$0xff]
        %v426 = vld [vmem:[%s414 + $0xb0] sm:$0xff]
        %v427 = vld [vmem:[%s414 + $0xc0] sm:$0xff]
        %v428 = vld [vmem:[%s414 + $0xd0] sm:$0xff]
        %v429 = vld [vmem:[%s414 + $0xe0] sm:$0xff]
        %v430 = vld [vmem:[%s414 + $0xf0] sm:$0xff]
        %v431 = vld [vmem:[%s414 + $0x100] sm:$0xff]
        %v432 = vld [vmem:[%s414 + $0x110] sm:$0xff]
        %v433 = vpack.c.bf16 %v418, %v417
        %v434 = vpack.c.bf16 %v420, %v419
        %v435 = vpack.c.bf16 %v422, %v421
        %v436 = vpack.c.bf16 %v424, %v423
        %v437 = vpack.c.bf16 %v426, %v425
        %v438 = vpack.c.bf16 %v428, %v427
        %v439 = vpack.c.bf16 %v430, %v429
        %v440 = vpack.c.bf16 %v432, %v431
        %v441 = vld [vmem:[%s1] sm:$0xf]
        %v442 = vld [vmem:[%s1 + $0x4] sm:$0xf]
        %v443 = vld [vmem:[%s1 + $0x8] sm:$0xf]
        %v444 = vld [vmem:[%s1 + $0xc] sm:$0xf]
        %v445 = vld [vmem:[%s1 + $0x10] sm:$0xf]
        %v446 = vld [vmem:[%s1 + $0x14] sm:$0xf]
        %v447 = vld [vmem:[%s1 + $0x18] sm:$0xf]
        %v448 = vld [vmem:[%s1 + $0x1c] sm:$0xf]
        %v449 = vld [vmem:[%s1 + $0x20] sm:$0xf]
        %v450 = vld [vmem:[%s1 + $0x24] sm:$0xf]
        %v451 = vld [vmem:[%s1 + $0x28] sm:$0xf]
        %v452 = vld [vmem:[%s1 + $0x2c] sm:$0xf]
        %v453 = vld [vmem:[%s1 + $0x30] sm:$0xf]
        %v454 = vld [vmem:[%s1 + $0x34] sm:$0xf]
        %v455 = vld [vmem:[%s1 + $0x38] sm:$0xf]
        %v456 = vld [vmem:[%s1 + $0x3c] sm:$0xf]
        %v457 = vld [vmem:[%s414 + $0x1] sm:$0xff]
        %v458 = vld [vmem:[%s414 + $0x11] sm:$0xff]
        %v459 = vld [vmem:[%s414 + $0x21] sm:$0xff]
        %v460 = vld [vmem:[%s414 + $0x31] sm:$0xff]
        %v461 = vld [vmem:[%s414 + $0x41] sm:$0xff]
        %v462 = vld [vmem:[%s414 + $0x51] sm:$0xff]
        %v463 = vld [vmem:[%s414 + $0x61] sm:$0xff]
        %v464 = vld [vmem:[%s414 + $0x71] sm:$0xff]
        %v465 = vld [vmem:[%s414 + $0xa1] sm:$0xff]
        %v466 = vld [vmem:[%s414 + $0xb1] sm:$0xff]
        %v467 = vld [vmem:[%s414 + $0xc1] sm:$0xff]
        %v468 = vld [vmem:[%s414 + $0xd1] sm:$0xff]
        %v469 = vld [vmem:[%s414 + $0xe1] sm:$0xff]
        %v470 = vld [vmem:[%s414 + $0xf1] sm:$0xff]
        %v471 = vld [vmem:[%s414 + $0x101] sm:$0xff]
        %v472 = vld [vmem:[%s414 + $0x111] sm:$0xff]
        %v473 = vpack.c.bf16 %v458, %v457
        %v474 = vpack.c.bf16 %v460, %v459
        %v475 = vpack.c.bf16 %v462, %v461
        %v476 = vpack.c.bf16 %v464, %v463
        %v477 = vpack.c.bf16 %v466, %v465
        %v478 = vpack.c.bf16 %v468, %v467
        %v479 = vpack.c.bf16 %v470, %v469
        %v480 = vpack.c.bf16 %v472, %v471
        %s481 = scalar_lea.vmem %s1, 64
        %v482 = vld [vmem:[%s481] sm:$0xf]
        %v483 = vld [vmem:[%s481 + $0x4] sm:$0xf]
        %v484 = vld [vmem:[%s481 + $0x8] sm:$0xf]
        %v485 = vld [vmem:[%s481 + $0xc] sm:$0xf]
        %v486 = vld [vmem:[%s481 + $0x10] sm:$0xf]
        %v487 = vld [vmem:[%s481 + $0x14] sm:$0xf]
        %v488 = vld [vmem:[%s481 + $0x18] sm:$0xf]
        %v489 = vld [vmem:[%s481 + $0x1c] sm:$0xf]
        %v490 = vld [vmem:[%s481 + $0x20] sm:$0xf]
        %v491 = vld [vmem:[%s481 + $0x24] sm:$0xf]
        %v492 = vld [vmem:[%s481 + $0x28] sm:$0xf]
        %v493 = vld [vmem:[%s481 + $0x2c] sm:$0xf]
        %v494 = vld [vmem:[%s481 + $0x30] sm:$0xf]
        %v495 = vld [vmem:[%s481 + $0x34] sm:$0xf]
        %v496 = vld [vmem:[%s481 + $0x38] sm:$0xf]
        %v497 = vld [vmem:[%s481 + $0x3c] sm:$0xf]
        %v514 = vunpack.c.l.b16 %v482
        %v515 = vunpack.c.l.b16 %v483
        %v516 = vunpack.c.l.b16 %v484
        %v517 = vunpack.c.l.b16 %v485
        %v518 = vunpack.c.l.b16 %v486
        %v519 = vunpack.c.l.b16 %v487
        %v520 = vunpack.c.l.b16 %v488
        %v521 = vunpack.c.l.b16 %v489
        %v522 = vunpack.c.l.b16 %v490
        %v523 = vunpack.c.l.b16 %v491
        %v524 = vunpack.c.l.b16 %v492
        %v525 = vunpack.c.l.b16 %v493
        %v526 = vunpack.c.l.b16 %v494
        %v527 = vunpack.c.l.b16 %v495
        %v528 = vunpack.c.l.b16 %v496
        %v529 = vunpack.c.l.b16 %v497
        %v530 = vpack.c.b16 %v515, %v514
        %v531 = vpack.c.b16 %v517, %v516
        %v532 = vpack.c.b16 %v519, %v518
        %v533 = vpack.c.b16 %v521, %v520
        %v534 = vpack.c.b16 %v523, %v522
        %v535 = vpack.c.b16 %v525, %v524
        %v536 = vpack.c.b16 %v527, %v526
        %v537 = vpack.c.b16 %v529, %v528
        %546 = vmatprep.subr.bf16.mxu0 0
        %547 = vmatpush1.bf16.msra.mxu0 %v537
        %548 = vmatprep.subr.bf16.mxu0 0
        %549 = vmatpush1.bf16.msra.mxu0 %v536
        %550 = vmatprep.subr.bf16.mxu0 0
        %551 = vmatpush1.bf16.msra.mxu0 %v535
        %552 = vmatprep.subr.bf16.mxu0 0
        %553 = vmatpush1.bf16.msra.mxu0 %v534
        %554 = vmatprep.subr.bf16.mxu0 0
        %555 = vmatpush1.bf16.msra.mxu0 %v533
        %556 = vmatprep.subr.bf16.mxu0 0
        %557 = vmatpush1.bf16.msra.mxu0 %v532
        %558 = vmatprep.subr.bf16.mxu0 0
        %559 = vmatpush1.bf16.msra.mxu0 %v531
        %560 = vmatprep.subr.bf16.mxu0 0
        %561 = vmatpush1.bf16.msra.mxu0 %v530
        %562 = vmatprep.subr.bf16.mxu0 0
        %563 = vmatpush2.bf16.msra.mxu0 0
        %564 = vmatprep.subr.bf16.mxu0 0
        %565 = vmatpush2.bf16.msra.mxu0 0
        %566 = vmatprep.subr.bf16.mxu0 0
        %567 = vmatpush2.bf16.msra.mxu0 0
        %568 = vmatprep.subr.bf16.mxu0 0
        %569 = vmatpush2.bf16.msra.mxu0 0
        %570 = vmatprep.subr.bf16.mxu0 0
        %571 = vmatpush2.bf16.msra.mxu0 0
        %572 = vmatprep.subr.bf16.mxu0 0
        %573 = vmatpush2.bf16.msra.mxu0 0
        %574 = vmatprep.subr.bf16.mxu0 0
        %575 = vmatpush2.bf16.msra.mxu0 0
        %576 = vmatprep.subr.bf16.mxu0 0
        %577 = vmatpush2.bf16.msra.mxu0 0
        %578 = vmatprep.mubr.bf16.mxu0 0
        %579 = vmatmul.mubr.bf16.gmra.mxu0 %v473
        %v580 = vpop.f32.mrf.mxu0
        %v581 = vadd.f32 0.0, %v580
        %v582 = vpop.f32.mrf.mxu0
        %v583 = vpop.f32.mrf.mxu0
        %v584 = vadd.f32 0.0, %v583
        %v585 = vpop.f32.mrf.mxu0
        %586 = vmatprep.mubr.bf16.mxu0 0
        %587 = vmatmul.mubr.bf16.gmra.mxu0 %v474
        %v588 = vpop.f32.mrf.mxu0
        %v589 = vadd.f32 0.0, %v588
        %v590 = vpop.f32.mrf.mxu0
        %v591 = vpop.f32.mrf.mxu0
        %v592 = vadd.f32 0.0, %v591
        %v593 = vpop.f32.mrf.mxu0
        %594 = vmatprep.mubr.bf16.mxu0 0
        %595 = vmatmul.mubr.bf16.gmra.mxu0 %v475
        %v596 = vpop.f32.mrf.mxu0
        %v597 = vadd.f32 0.0, %v596
        %v598 = vpop.f32.mrf.mxu0
        %v599 = vpop.f32.mrf.mxu0
        %v600 = vadd.f32 0.0, %v599
        %v601 = vpop.f32.mrf.mxu0
        %602 = vmatprep.mubr.bf16.mxu0 0
        %603 = vmatmul.mubr.bf16.gmra.mxu0 %v476
        %v604 = vpop.f32.mrf.mxu0
        %v605 = vadd.f32 0.0, %v604
        %v606 = vpop.f32.mrf.mxu0
        %v607 = vpop.f32.mrf.mxu0
        %v608 = vadd.f32 0.0, %v607
        %v609 = vpop.f32.mrf.mxu0
        %610 = vmatprep.mubr.bf16.mxu0 0
        %611 = vmatmul.mubr.bf16.gmra.mxu0 %v477
        %v612 = vpop.f32.mrf.mxu0
        %v613 = vadd.f32 0.0, %v612
        %v614 = vpop.f32.mrf.mxu0
        %v615 = vpop.f32.mrf.mxu0
        %v616 = vadd.f32 0.0, %v615
        %v617 = vpop.f32.mrf.mxu0
        %618 = vmatprep.mubr.bf16.mxu0 0
        %619 = vmatmul.mubr.bf16.gmra.mxu0 %v478
        %v620 = vpop.f32.mrf.mxu0
        %v621 = vadd.f32 0.0, %v620
        %v622 = vpop.f32.mrf.mxu0
        %v623 = vpop.f32.mrf.mxu0
        %v624 = vadd.f32 0.0, %v623
        %v625 = vpop.f32.mrf.mxu0
        %626 = vmatprep.mubr.bf16.mxu0 0
        %627 = vmatmul.mubr.bf16.gmra.mxu0 %v479
        %v628 = vpop.f32.mrf.mxu0
        %v629 = vadd.f32 0.0, %v628
        %v630 = vpop.f32.mrf.mxu0
        %v631 = vpop.f32.mrf.mxu0
        %v632 = vadd.f32 0.0, %v631
        %v633 = vpop.f32.mrf.mxu0
        %634 = vmatprep.mubr.bf16.mxu0 0
        %635 = vmatmul.mubr.bf16.gmra.mxu0 %v480
        %v636 = vpop.f32.mrf.mxu0
        %v637 = vadd.f32 0.0, %v636
        %v638 = vpop.f32.mrf.mxu0
        %v639 = vpop.f32.mrf.mxu0
        %v640 = vadd.f32 0.0, %v639
        %v641 = vpop.f32.mrf.mxu0
        %642 = vdwg.mxu0
        %v659 = vunpack.c.l.b16 %v441
        %v660 = vunpack.c.l.b16 %v442
        %v661 = vunpack.c.l.b16 %v443
        %v662 = vunpack.c.l.b16 %v444
        %v663 = vunpack.c.l.b16 %v445
        %v664 = vunpack.c.l.b16 %v446
        %v665 = vunpack.c.l.b16 %v447
        %v666 = vunpack.c.l.b16 %v448
        %v667 = vunpack.c.l.b16 %v449
        %v668 = vunpack.c.l.b16 %v450
        %v669 = vunpack.c.l.b16 %v451
        %v670 = vunpack.c.l.b16 %v452
        %v671 = vunpack.c.l.b16 %v453
        %v672 = vunpack.c.l.b16 %v454
        %v673 = vunpack.c.l.b16 %v455
        %v674 = vunpack.c.l.b16 %v456
        %v675 = vpack.c.b16 %v660, %v659
        %v676 = vpack.c.b16 %v662, %v661
        %v677 = vpack.c.b16 %v664, %v663
        %v678 = vpack.c.b16 %v666, %v665
        %v679 = vpack.c.b16 %v668, %v667
        %v680 = vpack.c.b16 %v670, %v669
        %v681 = vpack.c.b16 %v672, %v671
        %v682 = vpack.c.b16 %v674, %v673
        %691 = vmatprep.subr.bf16.mxu0 0
        %692 = vmatpush1.bf16.msra.mxu0 %v682
        %693 = vmatprep.subr.bf16.mxu0 0
        %694 = vmatpush1.bf16.msra.mxu0 %v681
        %695 = vmatprep.subr.bf16.mxu0 0
        %696 = vmatpush1.bf16.msra.mxu0 %v680
        %697 = vmatprep.subr.bf16.mxu0 0
        %698 = vmatpush1.bf16.msra.mxu0 %v679
        %699 = vmatprep.subr.bf16.mxu0 0
        %700 = vmatpush1.bf16.msra.mxu0 %v678
        %701 = vmatprep.subr.bf16.mxu0 0
        %702 = vmatpush1.bf16.msra.mxu0 %v677
        %703 = vmatprep.subr.bf16.mxu0 0
        %704 = vmatpush1.bf16.msra.mxu0 %v676
        %705 = vmatprep.subr.bf16.mxu0 0
        %706 = vmatpush1.bf16.msra.mxu0 %v675
        %707 = vmatprep.subr.bf16.mxu0 0
        %708 = vmatpush2.bf16.msra.mxu0 0
        %709 = vmatprep.subr.bf16.mxu0 0
        %710 = vmatpush2.bf16.msra.mxu0 0
        %711 = vmatprep.subr.bf16.mxu0 0
        %712 = vmatpush2.bf16.msra.mxu0 0
        %713 = vmatprep.subr.bf16.mxu0 0
        %714 = vmatpush2.bf16.msra.mxu0 0
        %715 = vmatprep.subr.bf16.mxu0 0
        %716 = vmatpush2.bf16.msra.mxu0 0
        %717 = vmatprep.subr.bf16.mxu0 0
        %718 = vmatpush2.bf16.msra.mxu0 0
        %719 = vmatprep.subr.bf16.mxu0 0
        %720 = vmatpush2.bf16.msra.mxu0 0
        %721 = vmatprep.subr.bf16.mxu0 0
        %722 = vmatpush2.bf16.msra.mxu0 0
        %723 = vmatprep.mubr.bf16.mxu0 0
        %724 = vmatmul.mubr.bf16.gmra.mxu0 %v433
        %v725 = vpop.f32.mrf.mxu0
        %v726 = vadd.f32 %v581, %v725
        %v727 = vpop.f32.mrf.mxu0
        %v728 = vpop.f32.mrf.mxu0
        %v729 = vadd.f32 %v584, %v728
        %v730 = vpop.f32.mrf.mxu0
        %731 = vmatprep.mubr.bf16.mxu0 0
        %732 = vmatmul.mubr.bf16.gmra.mxu0 %v434
        %v733 = vpop.f32.mrf.mxu0
        %v734 = vadd.f32 %v589, %v733
        %v735 = vpop.f32.mrf.mxu0
        %v736 = vpop.f32.mrf.mxu0
        %v737 = vadd.f32 %v592, %v736
        %v738 = vpop.f32.mrf.mxu0
        %739 = vmatprep.mubr.bf16.mxu0 0
        %740 = vmatmul.mubr.bf16.gmra.mxu0 %v435
        %v741 = vpop.f32.mrf.mxu0
        %v742 = vadd.f32 %v597, %v741
        %v743 = vpop.f32.mrf.mxu0
        %v744 = vpop.f32.mrf.mxu0
        %v745 = vadd.f32 %v600, %v744
        %v746 = vpop.f32.mrf.mxu0
        %747 = vmatprep.mubr.bf16.mxu0 0
        %748 = vmatmul.mubr.bf16.gmra.mxu0 %v436
        %v749 = vpop.f32.mrf.mxu0
        %v750 = vadd.f32 %v605, %v749
        %v751 = vpop.f32.mrf.mxu0
        %v752 = vpop.f32.mrf.mxu0
        %v753 = vadd.f32 %v608, %v752
        %v754 = vpop.f32.mrf.mxu0
        %755 = vmatprep.mubr.bf16.mxu0 0
        %756 = vmatmul.mubr.bf16.gmra.mxu0 %v437
        %v757 = vpop.f32.mrf.mxu0
        %v758 = vadd.f32 %v613, %v757
        %v759 = vpop.f32.mrf.mxu0
        %v760 = vpop.f32.mrf.mxu0
        %v761 = vadd.f32 %v616, %v760
        %v762 = vpop.f32.mrf.mxu0
        %763 = vmatprep.mubr.bf16.mxu0 0
        %764 = vmatmul.mubr.bf16.gmra.mxu0 %v438
        %v765 = vpop.f32.mrf.mxu0
        %v766 = vadd.f32 %v621, %v765
        %v767 = vpop.f32.mrf.mxu0
        %v768 = vpop.f32.mrf.mxu0
        %v769 = vadd.f32 %v624, %v768
        %v770 = vpop.f32.mrf.mxu0
        %771 = vmatprep.mubr.bf16.mxu0 0
        %772 = vmatmul.mubr.bf16.gmra.mxu0 %v439
        %v773 = vpop.f32.mrf.mxu0
        %v774 = vadd.f32 %v629, %v773
        %v775 = vpop.f32.mrf.mxu0
        %v776 = vpop.f32.mrf.mxu0
        %v777 = vadd.f32 %v632, %v776
        %v778 = vpop.f32.mrf.mxu0
        %779 = vmatprep.mubr.bf16.mxu0 0
        %780 = vmatmul.mubr.bf16.gmra.mxu0 %v440
        %v781 = vpop.f32.mrf.mxu0
        %v782 = vadd.f32 %v637, %v781
        %v783 = vpop.f32.mrf.mxu0
        %v784 = vpop.f32.mrf.mxu0
        %v785 = vadd.f32 %v640, %v784
        %v786 = vpop.f32.mrf.mxu0
        %787 = vdwg.mxu0
        %v788 = vld [vmem:[%s414 + $0x2] sm:$0xff]
        %v789 = vld [vmem:[%s414 + $0x12] sm:$0xff]
        %v790 = vld [vmem:[%s414 + $0x22] sm:$0xff]
        %v791 = vld [vmem:[%s414 + $0x32] sm:$0xff]
        %v792 = vld [vmem:[%s414 + $0x42] sm:$0xff]
        %v793 = vld [vmem:[%s414 + $0x52] sm:$0xff]
        %v794 = vld [vmem:[%s414 + $0x62] sm:$0xff]
        %v795 = vld [vmem:[%s414 + $0x72] sm:$0xff]
        %v796 = vld [vmem:[%s414 + $0xa2] sm:$0xff]
        %v797 = vld [vmem:[%s414 + $0xb2] sm:$0xff]
        %v798 = vld [vmem:[%s414 + $0xc2] sm:$0xff]
        %v799 = vld [vmem:[%s414 + $0xd2] sm:$0xff]
        %v800 = vld [vmem:[%s414 + $0xe2] sm:$0xff]
        %v801 = vld [vmem:[%s414 + $0xf2] sm:$0xff]
        %v802 = vld [vmem:[%s414 + $0x102] sm:$0xff]
        %v803 = vld [vmem:[%s414 + $0x112] sm:$0xff]
        %v804 = vpack.c.bf16 %v789, %v788
        %v805 = vpack.c.bf16 %v791, %v790
        %v806 = vpack.c.bf16 %v793, %v792
        %v807 = vpack.c.bf16 %v795, %v794
        %v808 = vpack.c.bf16 %v797, %v796
        %v809 = vpack.c.bf16 %v799, %v798
        %v810 = vpack.c.bf16 %v801, %v800
        %v811 = vpack.c.bf16 %v803, %v802
        %s812 = scalar_lea.vmem %s1, 128
        %v813 = vld [vmem:[%s812] sm:$0xf]
        %v814 = vld [vmem:[%s812 + $0x4] sm:$0xf]
        %v815 = vld [vmem:[%s812 + $0x8] sm:$0xf]
        %v816 = vld [vmem:[%s812 + $0xc] sm:$0xf]
        %v817 = vld [vmem:[%s812 + $0x10] sm:$0xf]
        %v818 = vld [vmem:[%s812 + $0x14] sm:$0xf]
        %v819 = vld [vmem:[%s812 + $0x18] sm:$0xf]
        %v820 = vld [vmem:[%s812 + $0x1c] sm:$0xf]
        %v821 = vld [vmem:[%s812 + $0x20] sm:$0xf]
        %v822 = vld [vmem:[%s812 + $0x24] sm:$0xf]
        %v823 = vld [vmem:[%s812 + $0x28] sm:$0xf]
        %v824 = vld [vmem:[%s812 + $0x2c] sm:$0xf]
        %v825 = vld [vmem:[%s812 + $0x30] sm:$0xf]
        %v826 = vld [vmem:[%s812 + $0x34] sm:$0xf]
        %v827 = vld [vmem:[%s812 + $0x38] sm:$0xf]
        %v828 = vld [vmem:[%s812 + $0x3c] sm:$0xf]
        %v845 = vunpack.c.l.b16 %v813
        %v846 = vunpack.c.l.b16 %v814
        %v847 = vunpack.c.l.b16 %v815
        %v848 = vunpack.c.l.b16 %v816
        %v849 = vunpack.c.l.b16 %v817
        %v850 = vunpack.c.l.b16 %v818
        %v851 = vunpack.c.l.b16 %v819
        %v852 = vunpack.c.l.b16 %v820
        %v853 = vunpack.c.l.b16 %v821
        %v854 = vunpack.c.l.b16 %v822
        %v855 = vunpack.c.l.b16 %v823
        %v856 = vunpack.c.l.b16 %v824
        %v857 = vunpack.c.l.b16 %v825
        %v858 = vunpack.c.l.b16 %v826
        %v859 = vunpack.c.l.b16 %v827
        %v860 = vunpack.c.l.b16 %v828
        %v861 = vpack.c.b16 %v846, %v845
        %v862 = vpack.c.b16 %v848, %v847
        %v863 = vpack.c.b16 %v850, %v849
        %v864 = vpack.c.b16 %v852, %v851
        %v865 = vpack.c.b16 %v854, %v853
        %v866 = vpack.c.b16 %v856, %v855
        %v867 = vpack.c.b16 %v858, %v857
        %v868 = vpack.c.b16 %v860, %v859
        %877 = vmatprep.subr.bf16.mxu0 0
        %878 = vmatpush1.bf16.msra.mxu0 %v868
        %879 = vmatprep.subr.bf16.mxu0 0
        %880 = vmatpush1.bf16.msra.mxu0 %v867
        %881 = vmatprep.subr.bf16.mxu0 0
        %882 = vmatpush1.bf16.msra.mxu0 %v866
        %883 = vmatprep.subr.bf16.mxu0 0
        %884 = vmatpush1.bf16.msra.mxu0 %v865
        %885 = vmatprep.subr.bf16.mxu0 0
        %886 = vmatpush1.bf16.msra.mxu0 %v864
        %887 = vmatprep.subr.bf16.mxu0 0
        %888 = vmatpush1.bf16.msra.mxu0 %v863
        %889 = vmatprep.subr.bf16.mxu0 0
        %890 = vmatpush1.bf16.msra.mxu0 %v862
        %891 = vmatprep.subr.bf16.mxu0 0
        %892 = vmatpush1.bf16.msra.mxu0 %v861
        %893 = vmatprep.subr.bf16.mxu0 0
        %894 = vmatpush2.bf16.msra.mxu0 0
        %895 = vmatprep.subr.bf16.mxu0 0
        %896 = vmatpush2.bf16.msra.mxu0 0
        %897 = vmatprep.subr.bf16.mxu0 0
        %898 = vmatpush2.bf16.msra.mxu0 0
        %899 = vmatprep.subr.bf16.mxu0 0
        %900 = vmatpush2.bf16.msra.mxu0 0
        %901 = vmatprep.subr.bf16.mxu0 0
        %902 = vmatpush2.bf16.msra.mxu0 0
        %903 = vmatprep.subr.bf16.mxu0 0
        %904 = vmatpush2.bf16.msra.mxu0 0
        %905 = vmatprep.subr.bf16.mxu0 0
        %906 = vmatpush2.bf16.msra.mxu0 0
        %907 = vmatprep.subr.bf16.mxu0 0
        %908 = vmatpush2.bf16.msra.mxu0 0
        %909 = vmatprep.mubr.bf16.mxu0 0
        %910 = vmatmul.mubr.bf16.gmra.mxu0 %v804
        %v911 = vpop.f32.mrf.mxu0
        %v912 = vadd.f32 0.0, %v911
        %v913 = vpop.f32.mrf.mxu0
        %v914 = vpop.f32.mrf.mxu0
        %v915 = vadd.f32 0.0, %v914
        %v916 = vpop.f32.mrf.mxu0
        %917 = vmatprep.mubr.bf16.mxu0 0
        %918 = vmatmul.mubr.bf16.gmra.mxu0 %v805
        %v919 = vpop.f32.mrf.mxu0
        %v920 = vadd.f32 0.0, %v919
        %v921 = vpop.f32.mrf.mxu0
        %v922 = vpop.f32.mrf.mxu0
        %v923 = vadd.f32 0.0, %v922
        %v924 = vpop.f32.mrf.mxu0
        %925 = vmatprep.mubr.bf16.mxu0 0
        %926 = vmatmul.mubr.bf16.gmra.mxu0 %v806
        %v927 = vpop.f32.mrf.mxu0
        %v928 = vadd.f32 0.0, %v927
        %v929 = vpop.f32.mrf.mxu0
        %v930 = vpop.f32.mrf.mxu0
        %v931 = vadd.f32 0.0, %v930
        %v932 = vpop.f32.mrf.mxu0
        %933 = vmatprep.mubr.bf16.mxu0 0
        %934 = vmatmul.mubr.bf16.gmra.mxu0 %v807
        %v935 = vpop.f32.mrf.mxu0
        %v936 = vadd.f32 0.0, %v935
        %v937 = vpop.f32.mrf.mxu0
        %v938 = vpop.f32.mrf.mxu0
        %v939 = vadd.f32 0.0, %v938
        %v940 = vpop.f32.mrf.mxu0
        %941 = vmatprep.mubr.bf16.mxu0 0
        %942 = vmatmul.mubr.bf16.gmra.mxu0 %v808
        %v943 = vpop.f32.mrf.mxu0
        %v944 = vadd.f32 0.0, %v943
        %v945 = vpop.f32.mrf.mxu0
        %v946 = vpop.f32.mrf.mxu0
        %v947 = vadd.f32 0.0, %v946
        %v948 = vpop.f32.mrf.mxu0
        %949 = vmatprep.mubr.bf16.mxu0 0
        %950 = vmatmul.mubr.bf16.gmra.mxu0 %v809
        %v951 = vpop.f32.mrf.mxu0
        %v952 = vadd.f32 0.0, %v951
        %v953 = vpop.f32.mrf.mxu0
        %v954 = vpop.f32.mrf.mxu0
        %v955 = vadd.f32 0.0, %v954
        %v956 = vpop.f32.mrf.mxu0
        %957 = vmatprep.mubr.bf16.mxu0 0
        %958 = vmatmul.mubr.bf16.gmra.mxu0 %v810
        %v959 = vpop.f32.mrf.mxu0
        %v960 = vadd.f32 0.0, %v959
        %v961 = vpop.f32.mrf.mxu0
        %v962 = vpop.f32.mrf.mxu0
        %v963 = vadd.f32 0.0, %v962
        %v964 = vpop.f32.mrf.mxu0
        %965 = vmatprep.mubr.bf16.mxu0 0
        %966 = vmatmul.mubr.bf16.gmra.mxu0 %v811
        %v967 = vpop.f32.mrf.mxu0
        %v968 = vadd.f32 0.0, %v967
        %v969 = vpop.f32.mrf.mxu0
        %v970 = vpop.f32.mrf.mxu0
        %v971 = vadd.f32 0.0, %v970
        %v972 = vpop.f32.mrf.mxu0
        %973 = vdwg.mxu0
        %v974 = vadd.f32 %v726, %v912
        %v975 = vadd.f32 %v729, %v915
        %v976 = vadd.f32 %v734, %v920
        %v977 = vadd.f32 %v737, %v923
        %v978 = vadd.f32 %v742, %v928
        %v979 = vadd.f32 %v745, %v931
        %v980 = vadd.f32 %v750, %v936
        %v981 = vadd.f32 %v753, %v939
        %v982 = vadd.f32 %v758, %v944
        %v983 = vadd.f32 %v761, %v947
        %v984 = vadd.f32 %v766, %v952
        %v985 = vadd.f32 %v769, %v955
        %v986 = vadd.f32 %v774, %v960
        %v987 = vadd.f32 %v777, %v963
        %v988 = vadd.f32 %v782, %v968
        %v989 = vadd.f32 %v785, %v971
        %s990 = scalar_lea.vmem %s414, 16
        %v991 = vld [vmem:[%s990] sm:$0xff]
        %v992 = vld [vmem:[%s990 + $0x10] sm:$0xff]
        %v993 = vld [vmem:[%s990 + $0x20] sm:$0xff]
        %v994 = vld [vmem:[%s990 + $0x30] sm:$0xff]
        %v995 = vld [vmem:[%s990 + $0x40] sm:$0xff]
        %v996 = vld [vmem:[%s990 + $0x50] sm:$0xff]
        %v997 = vld [vmem:[%s990 + $0x60] sm:$0xff]
        %v998 = vld [vmem:[%s990 + $0x70] sm:$0xff]
        %v999 = vld [vmem:[%s990 + $0xa0] sm:$0xff]
        %v1000 = vld [vmem:[%s990 + $0xb0] sm:$0xff]
        %v1001 = vld [vmem:[%s990 + $0xc0] sm:$0xff]
        %v1002 = vld [vmem:[%s990 + $0xd0] sm:$0xff]
        %v1003 = vld [vmem:[%s990 + $0xe0] sm:$0xff]
        %v1004 = vld [vmem:[%s990 + $0xf0] sm:$0xff]
        %v1005 = vld [vmem:[%s990 + $0x100] sm:$0xff]
        %v1006 = vld [vmem:[%s990 + $0x110] sm:$0xff]
        %v1007 = vpack.c.bf16 %v992, %v991
        %v1008 = vpack.c.bf16 %v994, %v993
        %v1009 = vpack.c.bf16 %v996, %v995
        %v1010 = vpack.c.bf16 %v998, %v997
        %v1011 = vpack.c.bf16 %v1000, %v999
        %v1012 = vpack.c.bf16 %v1002, %v1001
        %v1013 = vpack.c.bf16 %v1004, %v1003
        %v1014 = vpack.c.bf16 %v1006, %v1005
        %s1015 = scalar_lea.vmem %s1, 192
        %v1016 = vld [vmem:[%s1015] sm:$0xf]
        %v1017 = vld [vmem:[%s1015 + $0x4] sm:$0xf]
        %v1018 = vld [vmem:[%s1015 + $0x8] sm:$0xf]
        %v1019 = vld [vmem:[%s1015 + $0xc] sm:$0xf]
        %v1020 = vld [vmem:[%s1015 + $0x10] sm:$0xf]
        %v1021 = vld [vmem:[%s1015 + $0x14] sm:$0xf]
        %v1022 = vld [vmem:[%s1015 + $0x18] sm:$0xf]
        %v1023 = vld [vmem:[%s1015 + $0x1c] sm:$0xf]
        %v1024 = vld [vmem:[%s1015 + $0x20] sm:$0xf]
        %v1025 = vld [vmem:[%s1015 + $0x24] sm:$0xf]
        %v1026 = vld [vmem:[%s1015 + $0x28] sm:$0xf]
        %v1027 = vld [vmem:[%s1015 + $0x2c] sm:$0xf]
        %v1028 = vld [vmem:[%s1015 + $0x30] sm:$0xf]
        %v1029 = vld [vmem:[%s1015 + $0x34] sm:$0xf]
        %v1030 = vld [vmem:[%s1015 + $0x38] sm:$0xf]
        %v1031 = vld [vmem:[%s1015 + $0x3c] sm:$0xf]
        %v1048 = vunpack.c.l.b16 %v1016
        %v1049 = vunpack.c.l.b16 %v1017
        %v1050 = vunpack.c.l.b16 %v1018
        %v1051 = vunpack.c.l.b16 %v1019
        %v1052 = vunpack.c.l.b16 %v1020
        %v1053 = vunpack.c.l.b16 %v1021
        %v1054 = vunpack.c.l.b16 %v1022
        %v1055 = vunpack.c.l.b16 %v1023
        %v1056 = vunpack.c.l.b16 %v1024
        %v1057 = vunpack.c.l.b16 %v1025
        %v1058 = vunpack.c.l.b16 %v1026
        %v1059 = vunpack.c.l.b16 %v1027
        %v1060 = vunpack.c.l.b16 %v1028
        %v1061 = vunpack.c.l.b16 %v1029
        %v1062 = vunpack.c.l.b16 %v1030
        %v1063 = vunpack.c.l.b16 %v1031
        %v1064 = vpack.c.b16 %v1049, %v1048
        %v1065 = vpack.c.b16 %v1051, %v1050
        %v1066 = vpack.c.b16 %v1053, %v1052
        %v1067 = vpack.c.b16 %v1055, %v1054
        %v1068 = vpack.c.b16 %v1057, %v1056
        %v1069 = vpack.c.b16 %v1059, %v1058
        %v1070 = vpack.c.b16 %v1061, %v1060
        %v1071 = vpack.c.b16 %v1063, %v1062
        %1080 = vmatprep.subr.bf16.mxu0 0
        %1081 = vmatpush1.bf16.msra.mxu0 %v1071
        %1082 = vmatprep.subr.bf16.mxu0 0
        %1083 = vmatpush1.bf16.msra.mxu0 %v1070
        %1084 = vmatprep.subr.bf16.mxu0 0
        %1085 = vmatpush1.bf16.msra.mxu0 %v1069
        %1086 = vmatprep.subr.bf16.mxu0 0
        %1087 = vmatpush1.bf16.msra.mxu0 %v1068
        %1088 = vmatprep.subr.bf16.mxu0 0
        %1089 = vmatpush1.bf16.msra.mxu0 %v1067
        %1090 = vmatprep.subr.bf16.mxu0 0
        %1091 = vmatpush1.bf16.msra.mxu0 %v1066
        %1092 = vmatprep.subr.bf16.mxu0 0
        %1093 = vmatpush1.bf16.msra.mxu0 %v1065
        %1094 = vmatprep.subr.bf16.mxu0 0
        %1095 = vmatpush1.bf16.msra.mxu0 %v1064
        %1096 = vmatprep.subr.bf16.mxu0 0
        %1097 = vmatpush2.bf16.msra.mxu0 0
        %1098 = vmatprep.subr.bf16.mxu0 0
        %1099 = vmatpush2.bf16.msra.mxu0 0
        %1100 = vmatprep.subr.bf16.mxu0 0
        %1101 = vmatpush2.bf16.msra.mxu0 0
        %1102 = vmatprep.subr.bf16.mxu0 0
        %1103 = vmatpush2.bf16.msra.mxu0 0
        %1104 = vmatprep.subr.bf16.mxu0 0
        %1105 = vmatpush2.bf16.msra.mxu0 0
        %1106 = vmatprep.subr.bf16.mxu0 0
        %1107 = vmatpush2.bf16.msra.mxu0 0
        %1108 = vmatprep.subr.bf16.mxu0 0
        %1109 = vmatpush2.bf16.msra.mxu0 0
        %1110 = vmatprep.subr.bf16.mxu0 0
        %1111 = vmatpush2.bf16.msra.mxu0 0
        %1112 = vmatprep.mubr.bf16.mxu0 0
        %1113 = vmatmul.mubr.bf16.gmra.mxu0 %v1007
        %v1114 = vpop.f32.mrf.mxu0
        %v1115 = vadd.f32 0.0, %v1114
        %v1116 = vpop.f32.mrf.mxu0
        %v1117 = vpop.f32.mrf.mxu0
        %v1118 = vadd.f32 0.0, %v1117
        %v1119 = vpop.f32.mrf.mxu0
        %1120 = vmatprep.mubr.bf16.mxu0 0
        %1121 = vmatmul.mubr.bf16.gmra.mxu0 %v1008
        %v1122 = vpop.f32.mrf.mxu0
        %v1123 = vadd.f32 0.0, %v1122
        %v1124 = vpop.f32.mrf.mxu0
        %v1125 = vpop.f32.mrf.mxu0
        %v1126 = vadd.f32 0.0, %v1125
        %v1127 = vpop.f32.mrf.mxu0
        %1128 = vmatprep.mubr.bf16.mxu0 0
        %1129 = vmatmul.mubr.bf16.gmra.mxu0 %v1009
        %v1130 = vpop.f32.mrf.mxu0
        %v1131 = vadd.f32 0.0, %v1130
        %v1132 = vpop.f32.mrf.mxu0
        %v1133 = vpop.f32.mrf.mxu0
        %v1134 = vadd.f32 0.0, %v1133
        %v1135 = vpop.f32.mrf.mxu0
        %1136 = vmatprep.mubr.bf16.mxu0 0
        %1137 = vmatmul.mubr.bf16.gmra.mxu0 %v1010
        %v1138 = vpop.f32.mrf.mxu0
        %v1139 = vadd.f32 0.0, %v1138
        %v1140 = vpop.f32.mrf.mxu0
        %v1141 = vpop.f32.mrf.mxu0
        %v1142 = vadd.f32 0.0, %v1141
        %v1143 = vpop.f32.mrf.mxu0
        %1144 = vmatprep.mubr.bf16.mxu0 0
        %1145 = vmatmul.mubr.bf16.gmra.mxu0 %v1011
        %v1146 = vpop.f32.mrf.mxu0
        %v1147 = vadd.f32 0.0, %v1146
        %v1148 = vpop.f32.mrf.mxu0
        %v1149 = vpop.f32.mrf.mxu0
        %v1150 = vadd.f32 0.0, %v1149
        %v1151 = vpop.f32.mrf.mxu0
        %1152 = vmatprep.mubr.bf16.mxu0 0
        %1153 = vmatmul.mubr.bf16.gmra.mxu0 %v1012
        %v1154 = vpop.f32.mrf.mxu0
        %v1155 = vadd.f32 0.0, %v1154
        %v1156 = vpop.f32.mrf.mxu0
        %v1157 = vpop.f32.mrf.mxu0
        %v1158 = vadd.f32 0.0, %v1157
        %v1159 = vpop.f32.mrf.mxu0
        %1160 = vmatprep.mubr.bf16.mxu0 0
        %1161 = vmatmul.mubr.bf16.gmra.mxu0 %v1013
        %v1162 = vpop.f32.mrf.mxu0
        %v1163 = vadd.f32 0.0, %v1162
        %v1164 = vpop.f32.mrf.mxu0
        %v1165 = vpop.f32.mrf.mxu0
        %v1166 = vadd.f32 0.0, %v1165
        %v1167 = vpop.f32.mrf.mxu0
        %1168 = vmatprep.mubr.bf16.mxu0 0
        %1169 = vmatmul.mubr.bf16.gmra.mxu0 %v1014
        %v1170 = vpop.f32.mrf.mxu0
        %v1171 = vadd.f32 0.0, %v1170
        %v1172 = vpop.f32.mrf.mxu0
        %v1173 = vpop.f32.mrf.mxu0
        %v1174 = vadd.f32 0.0, %v1173
        %v1175 = vpop.f32.mrf.mxu0
        %1176 = vdwg.mxu0
        %v1177 = vadd.f32 %v974, %v1115
        %v1178 = vadd.f32 %v975, %v1118
        %v1179 = vadd.f32 %v976, %v1123
        %v1180 = vadd.f32 %v977, %v1126
        %v1181 = vadd.f32 %v978, %v1131
        %v1182 = vadd.f32 %v979, %v1134
        %v1183 = vadd.f32 %v980, %v1139
        %v1184 = vadd.f32 %v981, %v1142
        %v1185 = vadd.f32 %v982, %v1147
        %v1186 = vadd.f32 %v983, %v1150
        %v1187 = vadd.f32 %v984, %v1155
        %v1188 = vadd.f32 %v985, %v1158
        %v1189 = vadd.f32 %v986, %v1163
        %v1190 = vadd.f32 %v987, %v1166
        %v1191 = vadd.f32 %v988, %v1171
        %v1192 = vadd.f32 %v989, %v1174
        %v1193 = vld [vmem:[%s990 + $0x1] sm:$0xff]
        %v1194 = vld [vmem:[%s990 + $0x11] sm:$0xff]
        %v1195 = vld [vmem:[%s990 + $0x21] sm:$0xff]
        %v1196 = vld [vmem:[%s990 + $0x31] sm:$0xff]
        %v1197 = vld [vmem:[%s990 + $0x41] sm:$0xff]
        %v1198 = vld [vmem:[%s990 + $0x51] sm:$0xff]
        %v1199 = vld [vmem:[%s990 + $0x61] sm:$0xff]
        %v1200 = vld [vmem:[%s990 + $0x71] sm:$0xff]
        %v1201 = vld [vmem:[%s990 + $0xa1] sm:$0xff]
        %v1202 = vld [vmem:[%s990 + $0xb1] sm:$0xff]
        %v1203 = vld [vmem:[%s990 + $0xc1] sm:$0xff]
        %v1204 = vld [vmem:[%s990 + $0xd1] sm:$0xff]
        %v1205 = vld [vmem:[%s990 + $0xe1] sm:$0xff]
        %v1206 = vld [vmem:[%s990 + $0xf1] sm:$0xff]
        %v1207 = vld [vmem:[%s990 + $0x101] sm:$0xff]
        %v1208 = vld [vmem:[%s990 + $0x111] sm:$0xff]
        %v1209 = vpack.c.bf16 %v1194, %v1193
        %v1210 = vpack.c.bf16 %v1196, %v1195
        %v1211 = vpack.c.bf16 %v1198, %v1197
        %v1212 = vpack.c.bf16 %v1200, %v1199
        %v1213 = vpack.c.bf16 %v1202, %v1201
        %v1214 = vpack.c.bf16 %v1204, %v1203
        %v1215 = vpack.c.bf16 %v1206, %v1205
        %v1216 = vpack.c.bf16 %v1208, %v1207
        %s1217 = scalar_lea.vmem %s1, 256
        %v1218 = vld [vmem:[%s1217] sm:$0xf]
        %v1219 = vld [vmem:[%s1217 + $0x4] sm:$0xf]
        %v1220 = vld [vmem:[%s1217 + $0x8] sm:$0xf]
        %v1221 = vld [vmem:[%s1217 + $0xc] sm:$0xf]
        %v1222 = vld [vmem:[%s1217 + $0x10] sm:$0xf]
        %v1223 = vld [vmem:[%s1217 + $0x14] sm:$0xf]
        %v1224 = vld [vmem:[%s1217 + $0x18] sm:$0xf]
        %v1225 = vld [vmem:[%s1217 + $0x1c] sm:$0xf]
        %v1226 = vld [vmem:[%s1217 + $0x20] sm:$0xf]
        %v1227 = vld [vmem:[%s1217 + $0x24] sm:$0xf]
        %v1228 = vld [vmem:[%s1217 + $0x28] sm:$0xf]
        %v1229 = vld [vmem:[%s1217 + $0x2c] sm:$0xf]
        %v1230 = vld [vmem:[%s1217 + $0x30] sm:$0xf]
        %v1231 = vld [vmem:[%s1217 + $0x34] sm:$0xf]
        %v1232 = vld [vmem:[%s1217 + $0x38] sm:$0xf]
        %v1233 = vld [vmem:[%s1217 + $0x3c] sm:$0xf]
        %v1250 = vunpack.c.l.b16 %v1218
        %v1251 = vunpack.c.l.b16 %v1219
        %v1252 = vunpack.c.l.b16 %v1220
        %v1253 = vunpack.c.l.b16 %v1221
        %v1254 = vunpack.c.l.b16 %v1222
        %v1255 = vunpack.c.l.b16 %v1223
        %v1256 = vunpack.c.l.b16 %v1224
        %v1257 = vunpack.c.l.b16 %v1225
        %v1258 = vunpack.c.l.b16 %v1226
        %v1259 = vunpack.c.l.b16 %v1227
        %v1260 = vunpack.c.l.b16 %v1228
        %v1261 = vunpack.c.l.b16 %v1229
        %v1262 = vunpack.c.l.b16 %v1230
        %v1263 = vunpack.c.l.b16 %v1231
        %v1264 = vunpack.c.l.b16 %v1232
        %v1265 = vunpack.c.l.b16 %v1233
        %v1266 = vpack.c.b16 %v1251, %v1250
        %v1267 = vpack.c.b16 %v1253, %v1252
        %v1268 = vpack.c.b16 %v1255, %v1254
        %v1269 = vpack.c.b16 %v1257, %v1256
        %v1270 = vpack.c.b16 %v1259, %v1258
        %v1271 = vpack.c.b16 %v1261, %v1260
        %v1272 = vpack.c.b16 %v1263, %v1262
        %v1273 = vpack.c.b16 %v1265, %v1264
        %1282 = vmatprep.subr.bf16.mxu0 0
        %1283 = vmatpush1.bf16.msra.mxu0 %v1273
        %1284 = vmatprep.subr.bf16.mxu0 0
        %1285 = vmatpush1.bf16.msra.mxu0 %v1272
        %1286 = vmatprep.subr.bf16.mxu0 0
        %1287 = vmatpush1.bf16.msra.mxu0 %v1271
        %1288 = vmatprep.subr.bf16.mxu0 0
        %1289 = vmatpush1.bf16.msra.mxu0 %v1270
        %1290 = vmatprep.subr.bf16.mxu0 0
        %1291 = vmatpush1.bf16.msra.mxu0 %v1269
        %1292 = vmatprep.subr.bf16.mxu0 0
        %1293 = vmatpush1.bf16.msra.mxu0 %v1268
        %1294 = vmatprep.subr.bf16.mxu0 0
        %1295 = vmatpush1.bf16.msra.mxu0 %v1267
        %1296 = vmatprep.subr.bf16.mxu0 0
        %1297 = vmatpush1.bf16.msra.mxu0 %v1266
        %1298 = vmatprep.subr.bf16.mxu0 0
        %1299 = vmatpush2.bf16.msra.mxu0 0
        %1300 = vmatprep.subr.bf16.mxu0 0
        %1301 = vmatpush2.bf16.msra.mxu0 0
        %1302 = vmatprep.subr.bf16.mxu0 0
        %1303 = vmatpush2.bf16.msra.mxu0 0
        %1304 = vmatprep.subr.bf16.mxu0 0
        %1305 = vmatpush2.bf16.msra.mxu0 0
        %1306 = vmatprep.subr.bf16.mxu0 0
        %1307 = vmatpush2.bf16.msra.mxu0 0
        %1308 = vmatprep.subr.bf16.mxu0 0
        %1309 = vmatpush2.bf16.msra.mxu0 0
        %1310 = vmatprep.subr.bf16.mxu0 0
        %1311 = vmatpush2.bf16.msra.mxu0 0
        %1312 = vmatprep.subr.bf16.mxu0 0
        %1313 = vmatpush2.bf16.msra.mxu0 0
        %1314 = vmatprep.mubr.bf16.mxu0 0
        %1315 = vmatmul.mubr.bf16.gmra.mxu0 %v1209
        %v1316 = vpop.f32.mrf.mxu0
        %v1317 = vadd.f32 0.0, %v1316
        %v1318 = vpop.f32.mrf.mxu0
        %v1319 = vpop.f32.mrf.mxu0
        %v1320 = vadd.f32 0.0, %v1319
        %v1321 = vpop.f32.mrf.mxu0
        %1322 = vmatprep.mubr.bf16.mxu0 0
        %1323 = vmatmul.mubr.bf16.gmra.mxu0 %v1210
        %v1324 = vpop.f32.mrf.mxu0
        %v1325 = vadd.f32 0.0, %v1324
        %v1326 = vpop.f32.mrf.mxu0
        %v1327 = vpop.f32.mrf.mxu0
        %v1328 = vadd.f32 0.0, %v1327
        %v1329 = vpop.f32.mrf.mxu0
        %1330 = vmatprep.mubr.bf16.mxu0 0
        %1331 = vmatmul.mubr.bf16.gmra.mxu0 %v1211
        %v1332 = vpop.f32.mrf.mxu0
        %v1333 = vadd.f32 0.0, %v1332
        %v1334 = vpop.f32.mrf.mxu0
        %v1335 = vpop.f32.mrf.mxu0
        %v1336 = vadd.f32 0.0, %v1335
        %v1337 = vpop.f32.mrf.mxu0
        %1338 = vmatprep.mubr.bf16.mxu0 0
        %1339 = vmatmul.mubr.bf16.gmra.mxu0 %v1212
        %v1340 = vpop.f32.mrf.mxu0
        %v1341 = vadd.f32 0.0, %v1340
        %v1342 = vpop.f32.mrf.mxu0
        %v1343 = vpop.f32.mrf.mxu0
        %v1344 = vadd.f32 0.0, %v1343
        %v1345 = vpop.f32.mrf.mxu0
        %1346 = vmatprep.mubr.bf16.mxu0 0
        %1347 = vmatmul.mubr.bf16.gmra.mxu0 %v1213
        %v1348 = vpop.f32.mrf.mxu0
        %v1349 = vadd.f32 0.0, %v1348
        %v1350 = vpop.f32.mrf.mxu0
        %v1351 = vpop.f32.mrf.mxu0
        %v1352 = vadd.f32 0.0, %v1351
        %v1353 = vpop.f32.mrf.mxu0
        %1354 = vmatprep.mubr.bf16.mxu0 0
        %1355 = vmatmul.mubr.bf16.gmra.mxu0 %v1214
        %v1356 = vpop.f32.mrf.mxu0
        %v1357 = vadd.f32 0.0, %v1356
        %v1358 = vpop.f32.mrf.mxu0
        %v1359 = vpop.f32.mrf.mxu0
        %v1360 = vadd.f32 0.0, %v1359
        %v1361 = vpop.f32.mrf.mxu0
        %1362 = vmatprep.mubr.bf16.mxu0 0
        %1363 = vmatmul.mubr.bf16.gmra.mxu0 %v1215
        %v1364 = vpop.f32.mrf.mxu0
        %v1365 = vadd.f32 0.0, %v1364
        %v1366 = vpop.f32.mrf.mxu0
        %v1367 = vpop.f32.mrf.mxu0
        %v1368 = vadd.f32 0.0, %v1367
        %v1369 = vpop.f32.mrf.mxu0
        %1370 = vmatprep.mubr.bf16.mxu0 0
        %1371 = vmatmul.mubr.bf16.gmra.mxu0 %v1216
        %v1372 = vpop.f32.mrf.mxu0
        %v1373 = vadd.f32 0.0, %v1372
        %v1374 = vpop.f32.mrf.mxu0
        %v1375 = vpop.f32.mrf.mxu0
        %v1376 = vadd.f32 0.0, %v1375
        %v1377 = vpop.f32.mrf.mxu0
        %1378 = vdwg.mxu0
        %v1379 = vadd.f32 %v1177, %v1317
        %v1380 = vadd.f32 %v1178, %v1320
        %v1381 = vadd.f32 %v1179, %v1325
        %v1382 = vadd.f32 %v1180, %v1328
        %v1383 = vadd.f32 %v1181, %v1333
        %v1384 = vadd.f32 %v1182, %v1336
        %v1385 = vadd.f32 %v1183, %v1341
        %v1386 = vadd.f32 %v1184, %v1344
        %v1387 = vadd.f32 %v1185, %v1349
        %v1388 = vadd.f32 %v1186, %v1352
        %v1389 = vadd.f32 %v1187, %v1357
        %v1390 = vadd.f32 %v1188, %v1360
        %v1391 = vadd.f32 %v1189, %v1365
        %v1392 = vadd.f32 %v1190, %v1368
        %v1393 = vadd.f32 %v1191, %v1373
        %v1394 = vadd.f32 %v1192, %v1376
        %v1395 = vld [vmem:[%s990 + $0x2] sm:$0xff]
        %v1396 = vld [vmem:[%s990 + $0x12] sm:$0xff]
        %v1397 = vld [vmem:[%s990 + $0x22] sm:$0xff]
        %v1398 = vld [vmem:[%s990 + $0x32] sm:$0xff]
        %v1399 = vld [vmem:[%s990 + $0x42] sm:$0xff]
        %v1400 = vld [vmem:[%s990 + $0x52] sm:$0xff]
        %v1401 = vld [vmem:[%s990 + $0x62] sm:$0xff]
        %v1402 = vld [vmem:[%s990 + $0x72] sm:$0xff]
        %v1403 = vld [vmem:[%s990 + $0xa2] sm:$0xff]
        %v1404 = vld [vmem:[%s990 + $0xb2] sm:$0xff]
        %v1405 = vld [vmem:[%s990 + $0xc2] sm:$0xff]
        %v1406 = vld [vmem:[%s990 + $0xd2] sm:$0xff]
        %v1407 = vld [vmem:[%s990 + $0xe2] sm:$0xff]
        %v1408 = vld [vmem:[%s990 + $0xf2] sm:$0xff]
        %v1409 = vld [vmem:[%s990 + $0x102] sm:$0xff]
        %v1410 = vld [vmem:[%s990 + $0x112] sm:$0xff]
        %v1411 = vpack.c.bf16 %v1396, %v1395
        %v1412 = vpack.c.bf16 %v1398, %v1397
        %v1413 = vpack.c.bf16 %v1400, %v1399
        %v1414 = vpack.c.bf16 %v1402, %v1401
        %v1415 = vpack.c.bf16 %v1404, %v1403
        %v1416 = vpack.c.bf16 %v1406, %v1405
        %v1417 = vpack.c.bf16 %v1408, %v1407
        %v1418 = vpack.c.bf16 %v1410, %v1409
        %s1419 = scalar_lea.vmem %s1, 320
        %v1420 = vld [vmem:[%s1419] sm:$0xf]
        %v1421 = vld [vmem:[%s1419 + $0x4] sm:$0xf]
        %v1422 = vld [vmem:[%s1419 + $0x8] sm:$0xf]
        %v1423 = vld [vmem:[%s1419 + $0xc] sm:$0xf]
        %v1424 = vld [vmem:[%s1419 + $0x10] sm:$0xf]
        %v1425 = vld [vmem:[%s1419 + $0x14] sm:$0xf]
        %v1426 = vld [vmem:[%s1419 + $0x18] sm:$0xf]
        %v1427 = vld [vmem:[%s1419 + $0x1c] sm:$0xf]
        %v1428 = vld [vmem:[%s1419 + $0x20] sm:$0xf]
        %v1429 = vld [vmem:[%s1419 + $0x24] sm:$0xf]
        %v1430 = vld [vmem:[%s1419 + $0x28] sm:$0xf]
        %v1431 = vld [vmem:[%s1419 + $0x2c] sm:$0xf]
        %v1432 = vld [vmem:[%s1419 + $0x30] sm:$0xf]
        %v1433 = vld [vmem:[%s1419 + $0x34] sm:$0xf]
        %v1434 = vld [vmem:[%s1419 + $0x38] sm:$0xf]
        %v1435 = vld [vmem:[%s1419 + $0x3c] sm:$0xf]
        %v1452 = vunpack.c.l.b16 %v1420
        %v1453 = vunpack.c.l.b16 %v1421
        %v1454 = vunpack.c.l.b16 %v1422
        %v1455 = vunpack.c.l.b16 %v1423
        %v1456 = vunpack.c.l.b16 %v1424
        %v1457 = vunpack.c.l.b16 %v1425
        %v1458 = vunpack.c.l.b16 %v1426
        %v1459 = vunpack.c.l.b16 %v1427
        %v1460 = vunpack.c.l.b16 %v1428
        %v1461 = vunpack.c.l.b16 %v1429
        %v1462 = vunpack.c.l.b16 %v1430
        %v1463 = vunpack.c.l.b16 %v1431
        %v1464 = vunpack.c.l.b16 %v1432
        %v1465 = vunpack.c.l.b16 %v1433
        %v1466 = vunpack.c.l.b16 %v1434
        %v1467 = vunpack.c.l.b16 %v1435
        %v1468 = vpack.c.b16 %v1453, %v1452
        %v1469 = vpack.c.b16 %v1455, %v1454
        %v1470 = vpack.c.b16 %v1457, %v1456
        %v1471 = vpack.c.b16 %v1459, %v1458
        %v1472 = vpack.c.b16 %v1461, %v1460
        %v1473 = vpack.c.b16 %v1463, %v1462
        %v1474 = vpack.c.b16 %v1465, %v1464
        %v1475 = vpack.c.b16 %v1467, %v1466
        %1484 = vmatprep.subr.bf16.mxu0 0
        %1485 = vmatpush1.bf16.msra.mxu0 %v1475
        %1486 = vmatprep.subr.bf16.mxu0 0
        %1487 = vmatpush1.bf16.msra.mxu0 %v1474
        %1488 = vmatprep.subr.bf16.mxu0 0
        %1489 = vmatpush1.bf16.msra.mxu0 %v1473
        %1490 = vmatprep.subr.bf16.mxu0 0
        %1491 = vmatpush1.bf16.msra.mxu0 %v1472
        %1492 = vmatprep.subr.bf16.mxu0 0
        %1493 = vmatpush1.bf16.msra.mxu0 %v1471
        %1494 = vmatprep.subr.bf16.mxu0 0
        %1495 = vmatpush1.bf16.msra.mxu0 %v1470
        %1496 = vmatprep.subr.bf16.mxu0 0
        %1497 = vmatpush1.bf16.msra.mxu0 %v1469
        %1498 = vmatprep.subr.bf16.mxu0 0
        %1499 = vmatpush1.bf16.msra.mxu0 %v1468
        %1500 = vmatprep.subr.bf16.mxu0 0
        %1501 = vmatpush2.bf16.msra.mxu0 0
        %1502 = vmatprep.subr.bf16.mxu0 0
        %1503 = vmatpush2.bf16.msra.mxu0 0
        %1504 = vmatprep.subr.bf16.mxu0 0
        %1505 = vmatpush2.bf16.msra.mxu0 0
        %1506 = vmatprep.subr.bf16.mxu0 0
        %1507 = vmatpush2.bf16.msra.mxu0 0
        %1508 = vmatprep.subr.bf16.mxu0 0
        %1509 = vmatpush2.bf16.msra.mxu0 0
        %1510 = vmatprep.subr.bf16.mxu0 0
        %1511 = vmatpush2.bf16.msra.mxu0 0
        %1512 = vmatprep.subr.bf16.mxu0 0
        %1513 = vmatpush2.bf16.msra.mxu0 0
        %1514 = vmatprep.subr.bf16.mxu0 0
        %1515 = vmatpush2.bf16.msra.mxu0 0
        %1516 = vmatprep.mubr.bf16.mxu0 0
        %1517 = vmatmul.mubr.bf16.gmra.mxu0 %v1411
        %v1518 = vpop.f32.mrf.mxu0
        %v1519 = vadd.f32 0.0, %v1518
        %v1520 = vpop.f32.mrf.mxu0
        %v1521 = vpop.f32.mrf.mxu0
        %v1522 = vadd.f32 0.0, %v1521
        %v1523 = vpop.f32.mrf.mxu0
        %1524 = vmatprep.mubr.bf16.mxu0 0
        %1525 = vmatmul.mubr.bf16.gmra.mxu0 %v1412
        %v1526 = vpop.f32.mrf.mxu0
        %v1527 = vadd.f32 0.0, %v1526
        %v1528 = vpop.f32.mrf.mxu0
        %v1529 = vpop.f32.mrf.mxu0
        %v1530 = vadd.f32 0.0, %v1529
        %v1531 = vpop.f32.mrf.mxu0
        %1532 = vmatprep.mubr.bf16.mxu0 0
        %1533 = vmatmul.mubr.bf16.gmra.mxu0 %v1413
        %v1534 = vpop.f32.mrf.mxu0
        %v1535 = vadd.f32 0.0, %v1534
        %v1536 = vpop.f32.mrf.mxu0
        %v1537 = vpop.f32.mrf.mxu0
        %v1538 = vadd.f32 0.0, %v1537
        %v1539 = vpop.f32.mrf.mxu0
        %1540 = vmatprep.mubr.bf16.mxu0 0
        %1541 = vmatmul.mubr.bf16.gmra.mxu0 %v1414
        %v1542 = vpop.f32.mrf.mxu0
        %v1543 = vadd.f32 0.0, %v1542
        %v1544 = vpop.f32.mrf.mxu0
        %v1545 = vpop.f32.mrf.mxu0
        %v1546 = vadd.f32 0.0, %v1545
        %v1547 = vpop.f32.mrf.mxu0
        %1548 = vmatprep.mubr.bf16.mxu0 0
        %1549 = vmatmul.mubr.bf16.gmra.mxu0 %v1415
        %v1550 = vpop.f32.mrf.mxu0
        %v1551 = vadd.f32 0.0, %v1550
        %v1552 = vpop.f32.mrf.mxu0
        %v1553 = vpop.f32.mrf.mxu0
        %v1554 = vadd.f32 0.0, %v1553
        %v1555 = vpop.f32.mrf.mxu0
        %1556 = vmatprep.mubr.bf16.mxu0 0
        %1557 = vmatmul.mubr.bf16.gmra.mxu0 %v1416
        %v1558 = vpop.f32.mrf.mxu0
        %v1559 = vadd.f32 0.0, %v1558
        %v1560 = vpop.f32.mrf.mxu0
        %v1561 = vpop.f32.mrf.mxu0
        %v1562 = vadd.f32 0.0, %v1561
        %v1563 = vpop.f32.mrf.mxu0
        %1564 = vmatprep.mubr.bf16.mxu0 0
        %1565 = vmatmul.mubr.bf16.gmra.mxu0 %v1417
        %v1566 = vpop.f32.mrf.mxu0
        %v1567 = vadd.f32 0.0, %v1566
        %v1568 = vpop.f32.mrf.mxu0
        %v1569 = vpop.f32.mrf.mxu0
        %v1570 = vadd.f32 0.0, %v1569
        %v1571 = vpop.f32.mrf.mxu0
        %1572 = vmatprep.mubr.bf16.mxu0 0
        %1573 = vmatmul.mubr.bf16.gmra.mxu0 %v1418
        %v1574 = vpop.f32.mrf.mxu0
        %v1575 = vadd.f32 0.0, %v1574
        %v1576 = vpop.f32.mrf.mxu0
        %v1577 = vpop.f32.mrf.mxu0
        %v1578 = vadd.f32 0.0, %v1577
        %v1579 = vpop.f32.mrf.mxu0
        %1580 = vdwg.mxu0
        %v1581 = vadd.f32 %v1379, %v1519
        %v1582 = vadd.f32 %v1380, %v1522
        %v1583 = vadd.f32 %v1381, %v1527
        %v1584 = vadd.f32 %v1382, %v1530
        %v1585 = vadd.f32 %v1383, %v1535
        %v1586 = vadd.f32 %v1384, %v1538
        %v1587 = vadd.f32 %v1385, %v1543
        %v1588 = vadd.f32 %v1386, %v1546
        %v1589 = vadd.f32 %v1387, %v1551
        %v1590 = vadd.f32 %v1388, %v1554
        %v1591 = vadd.f32 %v1389, %v1559
        %v1592 = vadd.f32 %v1390, %v1562
        %v1593 = vadd.f32 %v1391, %v1567
        %v1594 = vadd.f32 %v1392, %v1570
        %v1595 = vadd.f32 %v1393, %v1575
        %v1596 = vadd.f32 %v1394, %v1578
        %s1597 = scalar_lea.vmem %s414, 32
        %v1598 = vld [vmem:[%s1597] sm:$0xff]
        %v1599 = vld [vmem:[%s1597 + $0x10] sm:$0xff]
        %v1600 = vld [vmem:[%s1597 + $0x20] sm:$0xff]
        %v1601 = vld [vmem:[%s1597 + $0x30] sm:$0xff]
        %v1602 = vld [vmem:[%s1597 + $0x40] sm:$0xff]
        %v1603 = vld [vmem:[%s1597 + $0x50] sm:$0xff]
        %v1604 = vld [vmem:[%s1597 + $0x60] sm:$0xff]
        %v1605 = vld [vmem:[%s1597 + $0x70] sm:$0xff]
        %v1606 = vld [vmem:[%s1597 + $0xa0] sm:$0xff]
        %v1607 = vld [vmem:[%s1597 + $0xb0] sm:$0xff]
        %v1608 = vld [vmem:[%s1597 + $0xc0] sm:$0xff]
        %v1609 = vld [vmem:[%s1597 + $0xd0] sm:$0xff]
        %v1610 = vld [vmem:[%s1597 + $0xe0] sm:$0xff]
        %v1611 = vld [vmem:[%s1597 + $0xf0] sm:$0xff]
        %v1612 = vld [vmem:[%s1597 + $0x100] sm:$0xff]
        %v1613 = vld [vmem:[%s1597 + $0x110] sm:$0xff]
        %v1614 = vpack.c.bf16 %v1599, %v1598
        %v1615 = vpack.c.bf16 %v1601, %v1600
        %v1616 = vpack.c.bf16 %v1603, %v1602
        %v1617 = vpack.c.bf16 %v1605, %v1604
        %v1618 = vpack.c.bf16 %v1607, %v1606
        %v1619 = vpack.c.bf16 %v1609, %v1608
        %v1620 = vpack.c.bf16 %v1611, %v1610
        %v1621 = vpack.c.bf16 %v1613, %v1612
        %s1622 = scalar_lea.vmem %s1, 384
        %v1623 = vld [vmem:[%s1622] sm:$0xf]
        %v1624 = vld [vmem:[%s1622 + $0x4] sm:$0xf]
        %v1625 = vld [vmem:[%s1622 + $0x8] sm:$0xf]
        %v1626 = vld [vmem:[%s1622 + $0xc] sm:$0xf]
        %v1627 = vld [vmem:[%s1622 + $0x10] sm:$0xf]
        %v1628 = vld [vmem:[%s1622 + $0x14] sm:$0xf]
        %v1629 = vld [vmem:[%s1622 + $0x18] sm:$0xf]
        %v1630 = vld [vmem:[%s1622 + $0x1c] sm:$0xf]
        %v1631 = vld [vmem:[%s1622 + $0x20] sm:$0xf]
        %v1632 = vld [vmem:[%s1622 + $0x24] sm:$0xf]
        %v1633 = vld [vmem:[%s1622 + $0x28] sm:$0xf]
        %v1634 = vld [vmem:[%s1622 + $0x2c] sm:$0xf]
        %v1635 = vld [vmem:[%s1622 + $0x30] sm:$0xf]
        %v1636 = vld [vmem:[%s1622 + $0x34] sm:$0xf]
        %v1637 = vld [vmem:[%s1622 + $0x38] sm:$0xf]
        %v1638 = vld [vmem:[%s1622 + $0x3c] sm:$0xf]
        %v1655 = vunpack.c.l.b16 %v1623
        %v1656 = vunpack.c.l.b16 %v1624
        %v1657 = vunpack.c.l.b16 %v1625
        %v1658 = vunpack.c.l.b16 %v1626
        %v1659 = vunpack.c.l.b16 %v1627
        %v1660 = vunpack.c.l.b16 %v1628
        %v1661 = vunpack.c.l.b16 %v1629
        %v1662 = vunpack.c.l.b16 %v1630
        %v1663 = vunpack.c.l.b16 %v1631
        %v1664 = vunpack.c.l.b16 %v1632
        %v1665 = vunpack.c.l.b16 %v1633
        %v1666 = vunpack.c.l.b16 %v1634
        %v1667 = vunpack.c.l.b16 %v1635
        %v1668 = vunpack.c.l.b16 %v1636
        %v1669 = vunpack.c.l.b16 %v1637
        %v1670 = vunpack.c.l.b16 %v1638
        %v1671 = vpack.c.b16 %v1656, %v1655
        %v1672 = vpack.c.b16 %v1658, %v1657
        %v1673 = vpack.c.b16 %v1660, %v1659
        %v1674 = vpack.c.b16 %v1662, %v1661
        %v1675 = vpack.c.b16 %v1664, %v1663
        %v1676 = vpack.c.b16 %v1666, %v1665
        %v1677 = vpack.c.b16 %v1668, %v1667
        %v1678 = vpack.c.b16 %v1670, %v1669
        %1687 = vmatprep.subr.bf16.mxu0 0
        %1688 = vmatpush1.bf16.msra.mxu0 %v1678
        %1689 = vmatprep.subr.bf16.mxu0 0
        %1690 = vmatpush1.bf16.msra.mxu0 %v1677
        %1691 = vmatprep.subr.bf16.mxu0 0
        %1692 = vmatpush1.bf16.msra.mxu0 %v1676
        %1693 = vmatprep.subr.bf16.mxu0 0
        %1694 = vmatpush1.bf16.msra.mxu0 %v1675
        %1695 = vmatprep.subr.bf16.mxu0 0
        %1696 = vmatpush1.bf16.msra.mxu0 %v1674
        %1697 = vmatprep.subr.bf16.mxu0 0
        %1698 = vmatpush1.bf16.msra.mxu0 %v1673
        %1699 = vmatprep.subr.bf16.mxu0 0
        %1700 = vmatpush1.bf16.msra.mxu0 %v1672
        %1701 = vmatprep.subr.bf16.mxu0 0
        %1702 = vmatpush1.bf16.msra.mxu0 %v1671
        %1703 = vmatprep.subr.bf16.mxu0 0
        %1704 = vmatpush2.bf16.msra.mxu0 0
        %1705 = vmatprep.subr.bf16.mxu0 0
        %1706 = vmatpush2.bf16.msra.mxu0 0
        %1707 = vmatprep.subr.bf16.mxu0 0
        %1708 = vmatpush2.bf16.msra.mxu0 0
        %1709 = vmatprep.subr.bf16.mxu0 0
        %1710 = vmatpush2.bf16.msra.mxu0 0
        %1711 = vmatprep.subr.bf16.mxu0 0
        %1712 = vmatpush2.bf16.msra.mxu0 0
        %1713 = vmatprep.subr.bf16.mxu0 0
        %1714 = vmatpush2.bf16.msra.mxu0 0
        %1715 = vmatprep.subr.bf16.mxu0 0
        %1716 = vmatpush2.bf16.msra.mxu0 0
        %1717 = vmatprep.subr.bf16.mxu0 0
        %1718 = vmatpush2.bf16.msra.mxu0 0
        %1719 = vmatprep.mubr.bf16.mxu0 0
        %1720 = vmatmul.mubr.bf16.gmra.mxu0 %v1614
        %v1721 = vpop.f32.mrf.mxu0
        %v1722 = vadd.f32 0.0, %v1721
        %v1723 = vpop.f32.mrf.mxu0
        %v1724 = vpop.f32.mrf.mxu0
        %v1725 = vadd.f32 0.0, %v1724
        %v1726 = vpop.f32.mrf.mxu0
        %1727 = vmatprep.mubr.bf16.mxu0 0
        %1728 = vmatmul.mubr.bf16.gmra.mxu0 %v1615
        %v1729 = vpop.f32.mrf.mxu0
        %v1730 = vadd.f32 0.0, %v1729
        %v1731 = vpop.f32.mrf.mxu0
        %v1732 = vpop.f32.mrf.mxu0
        %v1733 = vadd.f32 0.0, %v1732
        %v1734 = vpop.f32.mrf.mxu0
        %1735 = vmatprep.mubr.bf16.mxu0 0
        %1736 = vmatmul.mubr.bf16.gmra.mxu0 %v1616
        %v1737 = vpop.f32.mrf.mxu0
        %v1738 = vadd.f32 0.0, %v1737
        %v1739 = vpop.f32.mrf.mxu0
        %v1740 = vpop.f32.mrf.mxu0
        %v1741 = vadd.f32 0.0, %v1740
        %v1742 = vpop.f32.mrf.mxu0
        %1743 = vmatprep.mubr.bf16.mxu0 0
        %1744 = vmatmul.mubr.bf16.gmra.mxu0 %v1617
        %v1745 = vpop.f32.mrf.mxu0
        %v1746 = vadd.f32 0.0, %v1745
        %v1747 = vpop.f32.mrf.mxu0
        %v1748 = vpop.f32.mrf.mxu0
        %v1749 = vadd.f32 0.0, %v1748
        %v1750 = vpop.f32.mrf.mxu0
        %1751 = vmatprep.mubr.bf16.mxu0 0
        %1752 = vmatmul.mubr.bf16.gmra.mxu0 %v1618
        %v1753 = vpop.f32.mrf.mxu0
        %v1754 = vadd.f32 0.0, %v1753
        %v1755 = vpop.f32.mrf.mxu0
        %v1756 = vpop.f32.mrf.mxu0
        %v1757 = vadd.f32 0.0, %v1756
        %v1758 = vpop.f32.mrf.mxu0
        %1759 = vmatprep.mubr.bf16.mxu0 0
        %1760 = vmatmul.mubr.bf16.gmra.mxu0 %v1619
        %v1761 = vpop.f32.mrf.mxu0
        %v1762 = vadd.f32 0.0, %v1761
        %v1763 = vpop.f32.mrf.mxu0
        %v1764 = vpop.f32.mrf.mxu0
        %v1765 = vadd.f32 0.0, %v1764
        %v1766 = vpop.f32.mrf.mxu0
        %1767 = vmatprep.mubr.bf16.mxu0 0
        %1768 = vmatmul.mubr.bf16.gmra.mxu0 %v1620
        %v1769 = vpop.f32.mrf.mxu0
        %v1770 = vadd.f32 0.0, %v1769
        %v1771 = vpop.f32.mrf.mxu0
        %v1772 = vpop.f32.mrf.mxu0
        %v1773 = vadd.f32 0.0, %v1772
        %v1774 = vpop.f32.mrf.mxu0
        %1775 = vmatprep.mubr.bf16.mxu0 0
        %1776 = vmatmul.mubr.bf16.gmra.mxu0 %v1621
        %v1777 = vpop.f32.mrf.mxu0
        %v1778 = vadd.f32 0.0, %v1777
        %v1779 = vpop.f32.mrf.mxu0
        %v1780 = vpop.f32.mrf.mxu0
        %v1781 = vadd.f32 0.0, %v1780
        %v1782 = vpop.f32.mrf.mxu0
        %1783 = vdwg.mxu0
        %v1784 = vadd.f32 %v1581, %v1722
        %v1785 = vadd.f32 %v1582, %v1725
        %v1786 = vadd.f32 %v1583, %v1730
        %v1787 = vadd.f32 %v1584, %v1733
        %v1788 = vadd.f32 %v1585, %v1738
        %v1789 = vadd.f32 %v1586, %v1741
        %v1790 = vadd.f32 %v1587, %v1746
        %v1791 = vadd.f32 %v1588, %v1749
        %v1792 = vadd.f32 %v1589, %v1754
        %v1793 = vadd.f32 %v1590, %v1757
        %v1794 = vadd.f32 %v1591, %v1762
        %v1795 = vadd.f32 %v1592, %v1765
        %v1796 = vadd.f32 %v1593, %v1770
        %v1797 = vadd.f32 %v1594, %v1773
        %v1798 = vadd.f32 %v1595, %v1778
        %v1799 = vadd.f32 %v1596, %v1781
        %v1800 = vld [vmem:[%s1597 + $0x1] sm:$0xff]
        %v1801 = vld [vmem:[%s1597 + $0x11] sm:$0xff]
        %v1802 = vld [vmem:[%s1597 + $0x21] sm:$0xff]
        %v1803 = vld [vmem:[%s1597 + $0x31] sm:$0xff]
        %v1804 = vld [vmem:[%s1597 + $0x41] sm:$0xff]
        %v1805 = vld [vmem:[%s1597 + $0x51] sm:$0xff]
        %v1806 = vld [vmem:[%s1597 + $0x61] sm:$0xff]
        %v1807 = vld [vmem:[%s1597 + $0x71] sm:$0xff]
        %v1808 = vld [vmem:[%s1597 + $0xa1] sm:$0xff]
        %v1809 = vld [vmem:[%s1597 + $0xb1] sm:$0xff]
        %v1810 = vld [vmem:[%s1597 + $0xc1] sm:$0xff]
        %v1811 = vld [vmem:[%s1597 + $0xd1] sm:$0xff]
        %v1812 = vld [vmem:[%s1597 + $0xe1] sm:$0xff]
        %v1813 = vld [vmem:[%s1597 + $0xf1] sm:$0xff]
        %v1814 = vld [vmem:[%s1597 + $0x101] sm:$0xff]
        %v1815 = vld [vmem:[%s1597 + $0x111] sm:$0xff]
        %v1816 = vpack.c.bf16 %v1801, %v1800
        %v1817 = vpack.c.bf16 %v1803, %v1802
        %v1818 = vpack.c.bf16 %v1805, %v1804
        %v1819 = vpack.c.bf16 %v1807, %v1806
        %v1820 = vpack.c.bf16 %v1809, %v1808
        %v1821 = vpack.c.bf16 %v1811, %v1810
        %v1822 = vpack.c.bf16 %v1813, %v1812
        %v1823 = vpack.c.bf16 %v1815, %v1814
        %s1824 = scalar_lea.vmem %s1, 448
        %v1825 = vld [vmem:[%s1824] sm:$0xf]
        %v1826 = vld [vmem:[%s1824 + $0x4] sm:$0xf]
        %v1827 = vld [vmem:[%s1824 + $0x8] sm:$0xf]
        %v1828 = vld [vmem:[%s1824 + $0xc] sm:$0xf]
        %v1829 = vld [vmem:[%s1824 + $0x10] sm:$0xf]
        %v1830 = vld [vmem:[%s1824 + $0x14] sm:$0xf]
        %v1831 = vld [vmem:[%s1824 + $0x18] sm:$0xf]
        %v1832 = vld [vmem:[%s1824 + $0x1c] sm:$0xf]
        %v1833 = vld [vmem:[%s1824 + $0x20] sm:$0xf]
        %v1834 = vld [vmem:[%s1824 + $0x24] sm:$0xf]
        %v1835 = vld [vmem:[%s1824 + $0x28] sm:$0xf]
        %v1836 = vld [vmem:[%s1824 + $0x2c] sm:$0xf]
        %v1837 = vld [vmem:[%s1824 + $0x30] sm:$0xf]
        %v1838 = vld [vmem:[%s1824 + $0x34] sm:$0xf]
        %v1839 = vld [vmem:[%s1824 + $0x38] sm:$0xf]
        %v1840 = vld [vmem:[%s1824 + $0x3c] sm:$0xf]
        %v1857 = vunpack.c.l.b16 %v1825
        %v1858 = vunpack.c.l.b16 %v1826
        %v1859 = vunpack.c.l.b16 %v1827
        %v1860 = vunpack.c.l.b16 %v1828
        %v1861 = vunpack.c.l.b16 %v1829
        %v1862 = vunpack.c.l.b16 %v1830
        %v1863 = vunpack.c.l.b16 %v1831
        %v1864 = vunpack.c.l.b16 %v1832
        %v1865 = vunpack.c.l.b16 %v1833
        %v1866 = vunpack.c.l.b16 %v1834
        %v1867 = vunpack.c.l.b16 %v1835
        %v1868 = vunpack.c.l.b16 %v1836
        %v1869 = vunpack.c.l.b16 %v1837
        %v1870 = vunpack.c.l.b16 %v1838
        %v1871 = vunpack.c.l.b16 %v1839
        %v1872 = vunpack.c.l.b16 %v1840
        %v1873 = vpack.c.b16 %v1858, %v1857
        %v1874 = vpack.c.b16 %v1860, %v1859
        %v1875 = vpack.c.b16 %v1862, %v1861
        %v1876 = vpack.c.b16 %v1864, %v1863
        %v1877 = vpack.c.b16 %v1866, %v1865
        %v1878 = vpack.c.b16 %v1868, %v1867
        %v1879 = vpack.c.b16 %v1870, %v1869
        %v1880 = vpack.c.b16 %v1872, %v1871
        %1889 = vmatprep.subr.bf16.mxu0 0
        %1890 = vmatpush1.bf16.msra.mxu0 %v1880
        %1891 = vmatprep.subr.bf16.mxu0 0
        %1892 = vmatpush1.bf16.msra.mxu0 %v1879
        %1893 = vmatprep.subr.bf16.mxu0 0
        %1894 = vmatpush1.bf16.msra.mxu0 %v1878
        %1895 = vmatprep.subr.bf16.mxu0 0
        %1896 = vmatpush1.bf16.msra.mxu0 %v1877
        %1897 = vmatprep.subr.bf16.mxu0 0
        %1898 = vmatpush1.bf16.msra.mxu0 %v1876
        %1899 = vmatprep.subr.bf16.mxu0 0
        %1900 = vmatpush1.bf16.msra.mxu0 %v1875
        %1901 = vmatprep.subr.bf16.mxu0 0
        %1902 = vmatpush1.bf16.msra.mxu0 %v1874
        %1903 = vmatprep.subr.bf16.mxu0 0
        %1904 = vmatpush1.bf16.msra.mxu0 %v1873
        %1905 = vmatprep.subr.bf16.mxu0 0
        %1906 = vmatpush2.bf16.msra.mxu0 0
        %1907 = vmatprep.subr.bf16.mxu0 0
        %1908 = vmatpush2.bf16.msra.mxu0 0
        %1909 = vmatprep.subr.bf16.mxu0 0
        %1910 = vmatpush2.bf16.msra.mxu0 0
        %1911 = vmatprep.subr.bf16.mxu0 0
        %1912 = vmatpush2.bf16.msra.mxu0 0
        %1913 = vmatprep.subr.bf16.mxu0 0
        %1914 = vmatpush2.bf16.msra.mxu0 0
        %1915 = vmatprep.subr.bf16.mxu0 0
        %1916 = vmatpush2.bf16.msra.mxu0 0
        %1917 = vmatprep.subr.bf16.mxu0 0
        %1918 = vmatpush2.bf16.msra.mxu0 0
        %1919 = vmatprep.subr.bf16.mxu0 0
        %1920 = vmatpush2.bf16.msra.mxu0 0
        %1921 = vmatprep.mubr.bf16.mxu0 0
        %1922 = vmatmul.mubr.bf16.gmra.mxu0 %v1816
        %v1923 = vpop.f32.mrf.mxu0
        %v1924 = vadd.f32 0.0, %v1923
        %v1925 = vpop.f32.mrf.mxu0
        %v1926 = vpop.f32.mrf.mxu0
        %v1927 = vadd.f32 0.0, %v1926
        %v1928 = vpop.f32.mrf.mxu0
        %1929 = vmatprep.mubr.bf16.mxu0 0
        %1930 = vmatmul.mubr.bf16.gmra.mxu0 %v1817
        %v1931 = vpop.f32.mrf.mxu0
        %v1932 = vadd.f32 0.0, %v1931
        %v1933 = vpop.f32.mrf.mxu0
        %v1934 = vpop.f32.mrf.mxu0
        %v1935 = vadd.f32 0.0, %v1934
        %v1936 = vpop.f32.mrf.mxu0
        %1937 = vmatprep.mubr.bf16.mxu0 0
        %1938 = vmatmul.mubr.bf16.gmra.mxu0 %v1818
        %v1939 = vpop.f32.mrf.mxu0
        %v1940 = vadd.f32 0.0, %v1939
        %v1941 = vpop.f32.mrf.mxu0
        %v1942 = vpop.f32.mrf.mxu0
        %v1943 = vadd.f32 0.0, %v1942
        %v1944 = vpop.f32.mrf.mxu0
        %1945 = vmatprep.mubr.bf16.mxu0 0
        %1946 = vmatmul.mubr.bf16.gmra.mxu0 %v1819
        %v1947 = vpop.f32.mrf.mxu0
        %v1948 = vadd.f32 0.0, %v1947
        %v1949 = vpop.f32.mrf.mxu0
        %v1950 = vpop.f32.mrf.mxu0
        %v1951 = vadd.f32 0.0, %v1950
        %v1952 = vpop.f32.mrf.mxu0
        %1953 = vmatprep.mubr.bf16.mxu0 0
        %1954 = vmatmul.mubr.bf16.gmra.mxu0 %v1820
        %v1955 = vpop.f32.mrf.mxu0
        %v1956 = vadd.f32 0.0, %v1955
        %v1957 = vpop.f32.mrf.mxu0
        %v1958 = vpop.f32.mrf.mxu0
        %v1959 = vadd.f32 0.0, %v1958
        %v1960 = vpop.f32.mrf.mxu0
        %1961 = vmatprep.mubr.bf16.mxu0 0
        %1962 = vmatmul.mubr.bf16.gmra.mxu0 %v1821
        %v1963 = vpop.f32.mrf.mxu0
        %v1964 = vadd.f32 0.0, %v1963
        %v1965 = vpop.f32.mrf.mxu0
        %v1966 = vpop.f32.mrf.mxu0
        %v1967 = vadd.f32 0.0, %v1966
        %v1968 = vpop.f32.mrf.mxu0
        %1969 = vmatprep.mubr.bf16.mxu0 0
        %1970 = vmatmul.mubr.bf16.gmra.mxu0 %v1822
        %v1971 = vpop.f32.mrf.mxu0
        %v1972 = vadd.f32 0.0, %v1971
        %v1973 = vpop.f32.mrf.mxu0
        %v1974 = vpop.f32.mrf.mxu0
        %v1975 = vadd.f32 0.0, %v1974
        %v1976 = vpop.f32.mrf.mxu0
        %1977 = vmatprep.mubr.bf16.mxu0 0
        %1978 = vmatmul.mubr.bf16.gmra.mxu0 %v1823
        %v1979 = vpop.f32.mrf.mxu0
        %v1980 = vadd.f32 0.0, %v1979
        %v1981 = vpop.f32.mrf.mxu0
        %v1982 = vpop.f32.mrf.mxu0
        %v1983 = vadd.f32 0.0, %v1982
        %v1984 = vpop.f32.mrf.mxu0
        %1985 = vdwg.mxu0
        %v1986 = vadd.f32 %v1784, %v1924
        %v1987 = vadd.f32 %v1785, %v1927
        %v1988 = vadd.f32 %v1786, %v1932
        %v1989 = vadd.f32 %v1787, %v1935
        %v1990 = vadd.f32 %v1788, %v1940
        %v1991 = vadd.f32 %v1789, %v1943
        %v1992 = vadd.f32 %v1790, %v1948
        %v1993 = vadd.f32 %v1791, %v1951
        %v1994 = vadd.f32 %v1792, %v1956
        %v1995 = vadd.f32 %v1793, %v1959
        %v1996 = vadd.f32 %v1794, %v1964
        %v1997 = vadd.f32 %v1795, %v1967
        %v1998 = vadd.f32 %v1796, %v1972
        %v1999 = vadd.f32 %v1797, %v1975
        %v2000 = vadd.f32 %v1798, %v1980
        %v2001 = vadd.f32 %v1799, %v1983
        %v2002 = vld [vmem:[%s1597 + $0x2] sm:$0xff]
        %v2003 = vld [vmem:[%s1597 + $0x12] sm:$0xff]
        %v2004 = vld [vmem:[%s1597 + $0x22] sm:$0xff]
        %v2005 = vld [vmem:[%s1597 + $0x32] sm:$0xff]
        %v2006 = vld [vmem:[%s1597 + $0x42] sm:$0xff]
        %v2007 = vld [vmem:[%s1597 + $0x52] sm:$0xff]
        %v2008 = vld [vmem:[%s1597 + $0x62] sm:$0xff]
        %v2009 = vld [vmem:[%s1597 + $0x72] sm:$0xff]
        %v2010 = vld [vmem:[%s1597 + $0xa2] sm:$0xff]
        %v2011 = vld [vmem:[%s1597 + $0xb2] sm:$0xff]
        %v2012 = vld [vmem:[%s1597 + $0xc2] sm:$0xff]
        %v2013 = vld [vmem:[%s1597 + $0xd2] sm:$0xff]
        %v2014 = vld [vmem:[%s1597 + $0xe2] sm:$0xff]
        %v2015 = vld [vmem:[%s1597 + $0xf2] sm:$0xff]
        %v2016 = vld [vmem:[%s1597 + $0x102] sm:$0xff]
        %v2017 = vld [vmem:[%s1597 + $0x112] sm:$0xff]
        %v2018 = vpack.c.bf16 %v2003, %v2002
        %v2019 = vpack.c.bf16 %v2005, %v2004
        %v2020 = vpack.c.bf16 %v2007, %v2006
        %v2021 = vpack.c.bf16 %v2009, %v2008
        %v2022 = vpack.c.bf16 %v2011, %v2010
        %v2023 = vpack.c.bf16 %v2013, %v2012
        %v2024 = vpack.c.bf16 %v2015, %v2014
        %v2025 = vpack.c.bf16 %v2017, %v2016
        %s2026 = scalar_lea.vmem %s1, 512
        %v2027 = vld [vmem:[%s2026] sm:$0xf]
        %v2028 = vld [vmem:[%s2026 + $0x4] sm:$0xf]
        %v2029 = vld [vmem:[%s2026 + $0x8] sm:$0xf]
        %v2030 = vld [vmem:[%s2026 + $0xc] sm:$0xf]
        %v2031 = vld [vmem:[%s2026 + $0x10] sm:$0xf]
        %v2032 = vld [vmem:[%s2026 + $0x14] sm:$0xf]
        %v2033 = vld [vmem:[%s2026 + $0x18] sm:$0xf]
        %v2034 = vld [vmem:[%s2026 + $0x1c] sm:$0xf]
        %v2035 = vld [vmem:[%s2026 + $0x20] sm:$0xf]
        %v2036 = vld [vmem:[%s2026 + $0x24] sm:$0xf]
        %v2037 = vld [vmem:[%s2026 + $0x28] sm:$0xf]
        %v2038 = vld [vmem:[%s2026 + $0x2c] sm:$0xf]
        %v2039 = vld [vmem:[%s2026 + $0x30] sm:$0xf]
        %v2040 = vld [vmem:[%s2026 + $0x34] sm:$0xf]
        %v2041 = vld [vmem:[%s2026 + $0x38] sm:$0xf]
        %v2042 = vld [vmem:[%s2026 + $0x3c] sm:$0xf]
        %v2059 = vunpack.c.l.b16 %v2027
        %v2060 = vunpack.c.l.b16 %v2028
        %v2061 = vunpack.c.l.b16 %v2029
        %v2062 = vunpack.c.l.b16 %v2030
        %v2063 = vunpack.c.l.b16 %v2031
        %v2064 = vunpack.c.l.b16 %v2032
        %v2065 = vunpack.c.l.b16 %v2033
        %v2066 = vunpack.c.l.b16 %v2034
        %v2067 = vunpack.c.l.b16 %v2035
        %v2068 = vunpack.c.l.b16 %v2036
        %v2069 = vunpack.c.l.b16 %v2037
        %v2070 = vunpack.c.l.b16 %v2038
        %v2071 = vunpack.c.l.b16 %v2039
        %v2072 = vunpack.c.l.b16 %v2040
        %v2073 = vunpack.c.l.b16 %v2041
        %v2074 = vunpack.c.l.b16 %v2042
        %v2075 = vpack.c.b16 %v2060, %v2059
        %v2076 = vpack.c.b16 %v2062, %v2061
        %v2077 = vpack.c.b16 %v2064, %v2063
        %v2078 = vpack.c.b16 %v2066, %v2065
        %v2079 = vpack.c.b16 %v2068, %v2067
        %v2080 = vpack.c.b16 %v2070, %v2069
        %v2081 = vpack.c.b16 %v2072, %v2071
        %v2082 = vpack.c.b16 %v2074, %v2073
        %2091 = vmatprep.subr.bf16.mxu0 0
        %2092 = vmatpush1.bf16.msra.mxu0 %v2082
        %2093 = vmatprep.subr.bf16.mxu0 0
        %2094 = vmatpush1.bf16.msra.mxu0 %v2081
        %2095 = vmatprep.subr.bf16.mxu0 0
        %2096 = vmatpush1.bf16.msra.mxu0 %v2080
        %2097 = vmatprep.subr.bf16.mxu0 0
        %2098 = vmatpush1.bf16.msra.mxu0 %v2079
        %2099 = vmatprep.subr.bf16.mxu0 0
        %2100 = vmatpush1.bf16.msra.mxu0 %v2078
        %2101 = vmatprep.subr.bf16.mxu0 0
        %2102 = vmatpush1.bf16.msra.mxu0 %v2077
        %2103 = vmatprep.subr.bf16.mxu0 0
        %2104 = vmatpush1.bf16.msra.mxu0 %v2076
        %2105 = vmatprep.subr.bf16.mxu0 0
        %2106 = vmatpush1.bf16.msra.mxu0 %v2075
        %2107 = vmatprep.subr.bf16.mxu0 0
        %2108 = vmatpush2.bf16.msra.mxu0 0
        %2109 = vmatprep.subr.bf16.mxu0 0
        %2110 = vmatpush2.bf16.msra.mxu0 0
        %2111 = vmatprep.subr.bf16.mxu0 0
        %2112 = vmatpush2.bf16.msra.mxu0 0
        %2113 = vmatprep.subr.bf16.mxu0 0
        %2114 = vmatpush2.bf16.msra.mxu0 0
        %2115 = vmatprep.subr.bf16.mxu0 0
        %2116 = vmatpush2.bf16.msra.mxu0 0
        %2117 = vmatprep.subr.bf16.mxu0 0
        %2118 = vmatpush2.bf16.msra.mxu0 0
        %2119 = vmatprep.subr.bf16.mxu0 0
        %2120 = vmatpush2.bf16.msra.mxu0 0
        %2121 = vmatprep.subr.bf16.mxu0 0
        %2122 = vmatpush2.bf16.msra.mxu0 0
        %2123 = vmatprep.mubr.bf16.mxu0 0
        %2124 = vmatmul.mubr.bf16.gmra.mxu0 %v2018
        %v2125 = vpop.f32.mrf.mxu0
        %v2126 = vadd.f32 0.0, %v2125
        %v2127 = vpop.f32.mrf.mxu0
        %v2128 = vpop.f32.mrf.mxu0
        %v2129 = vadd.f32 0.0, %v2128
        %v2130 = vpop.f32.mrf.mxu0
        %2131 = vmatprep.mubr.bf16.mxu0 0
        %2132 = vmatmul.mubr.bf16.gmra.mxu0 %v2019
        %v2133 = vpop.f32.mrf.mxu0
        %v2134 = vadd.f32 0.0, %v2133
        %v2135 = vpop.f32.mrf.mxu0
        %v2136 = vpop.f32.mrf.mxu0
        %v2137 = vadd.f32 0.0, %v2136
        %v2138 = vpop.f32.mrf.mxu0
        %2139 = vmatprep.mubr.bf16.mxu0 0
        %2140 = vmatmul.mubr.bf16.gmra.mxu0 %v2020
        %v2141 = vpop.f32.mrf.mxu0
        %v2142 = vadd.f32 0.0, %v2141
        %v2143 = vpop.f32.mrf.mxu0
        %v2144 = vpop.f32.mrf.mxu0
        %v2145 = vadd.f32 0.0, %v2144
        %v2146 = vpop.f32.mrf.mxu0
        %2147 = vmatprep.mubr.bf16.mxu0 0
        %2148 = vmatmul.mubr.bf16.gmra.mxu0 %v2021
        %v2149 = vpop.f32.mrf.mxu0
        %v2150 = vadd.f32 0.0, %v2149
        %v2151 = vpop.f32.mrf.mxu0
        %v2152 = vpop.f32.mrf.mxu0
        %v2153 = vadd.f32 0.0, %v2152
        %v2154 = vpop.f32.mrf.mxu0
        %2155 = vmatprep.mubr.bf16.mxu0 0
        %2156 = vmatmul.mubr.bf16.gmra.mxu0 %v2022
        %v2157 = vpop.f32.mrf.mxu0
        %v2158 = vadd.f32 0.0, %v2157
        %v2159 = vpop.f32.mrf.mxu0
        %v2160 = vpop.f32.mrf.mxu0
        %v2161 = vadd.f32 0.0, %v2160
        %v2162 = vpop.f32.mrf.mxu0
        %2163 = vmatprep.mubr.bf16.mxu0 0
        %2164 = vmatmul.mubr.bf16.gmra.mxu0 %v2023
        %v2165 = vpop.f32.mrf.mxu0
        %v2166 = vadd.f32 0.0, %v2165
        %v2167 = vpop.f32.mrf.mxu0
        %v2168 = vpop.f32.mrf.mxu0
        %v2169 = vadd.f32 0.0, %v2168
        %v2170 = vpop.f32.mrf.mxu0
        %2171 = vmatprep.mubr.bf16.mxu0 0
        %2172 = vmatmul.mubr.bf16.gmra.mxu0 %v2024
        %v2173 = vpop.f32.mrf.mxu0
        %v2174 = vadd.f32 0.0, %v2173
        %v2175 = vpop.f32.mrf.mxu0
        %v2176 = vpop.f32.mrf.mxu0
        %v2177 = vadd.f32 0.0, %v2176
        %v2178 = vpop.f32.mrf.mxu0
        %2179 = vmatprep.mubr.bf16.mxu0 0
        %2180 = vmatmul.mubr.bf16.gmra.mxu0 %v2025
        %v2181 = vpop.f32.mrf.mxu0
        %v2182 = vadd.f32 0.0, %v2181
        %v2183 = vpop.f32.mrf.mxu0
        %v2184 = vpop.f32.mrf.mxu0
        %v2185 = vadd.f32 0.0, %v2184
        %v2186 = vpop.f32.mrf.mxu0
        %2187 = vdwg.mxu0
        %v2188 = vadd.f32 %v1986, %v2126
        %v2189 = vadd.f32 %v1987, %v2129
        %v2190 = vadd.f32 %v1988, %v2134
        %v2191 = vadd.f32 %v1989, %v2137
        %v2192 = vadd.f32 %v1990, %v2142
        %v2193 = vadd.f32 %v1991, %v2145
        %v2194 = vadd.f32 %v1992, %v2150
        %v2195 = vadd.f32 %v1993, %v2153
        %v2196 = vadd.f32 %v1994, %v2158
        %v2197 = vadd.f32 %v1995, %v2161
        %v2198 = vadd.f32 %v1996, %v2166
        %v2199 = vadd.f32 %v1997, %v2169
        %v2200 = vadd.f32 %v1998, %v2174
        %v2201 = vadd.f32 %v1999, %v2177
        %v2202 = vadd.f32 %v2000, %v2182
        %v2203 = vadd.f32 %v2001, %v2185
        %v2204 = vld [vmem:[%s2] sm:$0x1]
        %v2206 = vlaneseq
        %v2207 = vshrl.u32 %v2206, 7
        %v2208 = vsub.s32 0, %v2207
        %v2209 = vrot.slane %v2204, %v2208
        %v2211 = vmul.f32 %v2188, %v2209
        %v2212 = vmul.f32 %v2189, %v2209
        %v2213 = vmul.f32 %v2190, %v2209
        %v2214 = vmul.f32 %v2191, %v2209
        %v2215 = vmul.f32 %v2192, %v2209
        %v2216 = vmul.f32 %v2193, %v2209
        %v2217 = vmul.f32 %v2194, %v2209
        %v2218 = vmul.f32 %v2195, %v2209
        %v2219 = vmul.f32 %v2196, %v2209
        %v2220 = vmul.f32 %v2197, %v2209
        %v2221 = vmul.f32 %v2198, %v2209
        %v2222 = vmul.f32 %v2199, %v2209
        %v2223 = vmul.f32 %v2200, %v2209
        %v2224 = vmul.f32 %v2201, %v2209
        %v2225 = vmul.f32 %v2202, %v2209
        %v2226 = vmul.f32 %v2203, %v2209
        %v2227 = vld [vmem:[%s3] sm:$0x1]
        %v2229 = vlaneseq
        %v2230 = vshrl.u32 %v2229, 7
        %v2231 = vsub.s32 0, %v2230
        %v2232 = vrot.slane %v2227, %v2231
        %v2234 = vadd.f32 %v2211, %v2232
        %v2235 = vadd.f32 %v2212, %v2232
        %v2236 = vadd.f32 %v2213, %v2232
        %v2237 = vadd.f32 %v2214, %v2232
        %v2238 = vadd.f32 %v2215, %v2232
        %v2239 = vadd.f32 %v2216, %v2232
        %v2240 = vadd.f32 %v2217, %v2232
        %v2241 = vadd.f32 %v2218, %v2232
        %v2242 = vadd.f32 %v2219, %v2232
        %v2243 = vadd.f32 %v2220, %v2232
        %v2244 = vadd.f32 %v2221, %v2232
        %v2245 = vadd.f32 %v2222, %v2232
        %v2246 = vadd.f32 %v2223, %v2232
        %v2247 = vadd.f32 %v2224, %v2232
        %v2248 = vadd.f32 %v2225, %v2232
        %v2249 = vadd.f32 %v2226, %v2232
        %v2250 = vmax.f32 %v2234, 0.0
        %v2251 = vmax.f32 %v2235, 0.0
        %v2252 = vmax.f32 %v2236, 0.0
        %v2253 = vmax.f32 %v2237, 0.0
        %v2254 = vmax.f32 %v2238, 0.0
        %v2255 = vmax.f32 %v2239, 0.0
        %v2256 = vmax.f32 %v2240, 0.0
        %v2257 = vmax.f32 %v2241, 0.0
        %v2258 = vmax.f32 %v2242, 0.0
        %v2259 = vmax.f32 %v2243, 0.0
        %v2260 = vmax.f32 %v2244, 0.0
        %v2261 = vmax.f32 %v2245, 0.0
        %v2262 = vmax.f32 %v2246, 0.0
        %v2263 = vmax.f32 %v2247, 0.0
        %v2264 = vmax.f32 %v2248, 0.0
        %v2265 = vmax.f32 %v2249, 0.0
        %v2266 = vmin.f32 %v2250, 6.0
        %v2267 = vmin.f32 %v2251, 6.0
        %v2268 = vmin.f32 %v2252, 6.0
        %v2269 = vmin.f32 %v2253, 6.0
        %v2270 = vmin.f32 %v2254, 6.0
        %v2271 = vmin.f32 %v2255, 6.0
        %v2272 = vmin.f32 %v2256, 6.0
        %v2273 = vmin.f32 %v2257, 6.0
        %v2274 = vmin.f32 %v2258, 6.0
        %v2275 = vmin.f32 %v2259, 6.0
        %v2276 = vmin.f32 %v2260, 6.0
        %v2277 = vmin.f32 %v2261, 6.0
        %v2278 = vmin.f32 %v2262, 6.0
        %v2279 = vmin.f32 %v2263, 6.0
        %v2280 = vmin.f32 %v2264, 6.0
        %v2281 = vmin.f32 %v2265, 6.0
        %v2282 = vadd.f32 %v2266, %v2267
        %v2283 = vadd.f32 %v2282, %v2268
        %v2284 = vadd.f32 %v2283, %v2269
        %v2285 = vadd.f32 %v2284, %v2270
        %v2286 = vadd.f32 %v2285, %v2271
        %v2287 = vadd.f32 %v2286, %v2272
        %v2288 = vadd.f32 %v2287, %v2273
        %v2289 = vrot.slane %v2288, 4
        %v2290 = vadd.f32 %v2288, %v2289
        %v2291 = vrot.slane %v2290, 2
        %v2292 = vadd.f32 %v2290, %v2291
        %v2293 = vrot.slane %v2292, 1
        %v2294 = vadd.f32 %v2292, %v2293
        %v2295 = vadd.f32 %v2274, %v2275
        %v2296 = vadd.f32 %v2295, %v2276
        %v2297 = vadd.f32 %v2296, %v2277
        %v2298 = vadd.f32 %v2297, %v2278
        %v2299 = vadd.f32 %v2298, %v2279
        %v2300 = vadd.f32 %v2299, %v2280
        %v2301 = vadd.f32 %v2300, %v2281
        %v2302 = vrot.slane %v2301, 4
        %v2303 = vadd.f32 %v2301, %v2302
        %v2304 = vrot.slane %v2303, 2
        %v2305 = vadd.f32 %v2303, %v2304
        %v2306 = vrot.slane %v2305, 1
        %v2307 = vadd.f32 %v2305, %v2306
        %v2308 = vmul.f32 %v2294, 0.015625
        %v2309 = vmul.f32 %v2307, 0.015625
        %v2310 = vpack.c.bf16 %v2308, %v2308
        %v2311 = vpack.c.bf16 %v2309, %v2309
        %v2312 = vld [vmem:[%s4] sm:$0xf]
        %v2313 = vld [vmem:[%s4 + $0x4] sm:$0xf]
        %v2314 = vld [vmem:[%s4 + $0x8] sm:$0xf]
        %v2315 = vld [vmem:[%s4 + $0xc] sm:$0xf]
        %v2316 = vld [vmem:[%s4 + $0x10] sm:$0xf]
        %v2317 = vld [vmem:[%s4 + $0x14] sm:$0xf]
        %v2318 = vld [vmem:[%s4 + $0x18] sm:$0xf]
        %v2319 = vld [vmem:[%s4 + $0x1c] sm:$0xf]
        %v2320 = vld [vmem:[%s4 + $0x20] sm:$0xf]
        %v2321 = vld [vmem:[%s4 + $0x24] sm:$0xf]
        %v2322 = vld [vmem:[%s4 + $0x28] sm:$0xf]
        %v2323 = vld [vmem:[%s4 + $0x2c] sm:$0xf]
        %v2324 = vld [vmem:[%s4 + $0x30] sm:$0xf]
        %v2325 = vld [vmem:[%s4 + $0x34] sm:$0xf]
        %v2326 = vld [vmem:[%s4 + $0x38] sm:$0xf]
        %v2327 = vld [vmem:[%s4 + $0x3c] sm:$0xf]
        %v2330 = vunpack.c.l.b16 %v2310
        %v2331 = vunpack.c.l.b16 %v2311
        %vm2332 = vcmask 1041409
        %v2333 = vsel %vm2332, %v2331, %v2330
        %v2334 = vpack.c.b16 %v2333, %v2333
        %v2352 = vunpack.c.l.b16 %v2312
        %v2353 = vunpack.c.l.b16 %v2313
        %v2354 = vunpack.c.l.b16 %v2314
        %v2355 = vunpack.c.l.b16 %v2315
        %v2356 = vunpack.c.l.b16 %v2316
        %v2357 = vunpack.c.l.b16 %v2317
        %v2358 = vunpack.c.l.b16 %v2318
        %v2359 = vunpack.c.l.b16 %v2319
        %v2360 = vunpack.c.l.b16 %v2320
        %v2361 = vunpack.c.l.b16 %v2321
        %v2362 = vunpack.c.l.b16 %v2322
        %v2363 = vunpack.c.l.b16 %v2323
        %v2364 = vunpack.c.l.b16 %v2324
        %v2365 = vunpack.c.l.b16 %v2325
        %v2366 = vunpack.c.l.b16 %v2326
        %v2367 = vunpack.c.l.b16 %v2327
        %v2368 = vpack.c.b16 %v2353, %v2352
        %v2369 = vpack.c.b16 %v2355, %v2354
        %v2370 = vpack.c.b16 %v2357, %v2356
        %v2371 = vpack.c.b16 %v2359, %v2358
        %v2372 = vpack.c.b16 %v2361, %v2360
        %v2373 = vpack.c.b16 %v2363, %v2362
        %v2374 = vpack.c.b16 %v2365, %v2364
        %v2375 = vpack.c.b16 %v2367, %v2366
        %2384 = vmatprep.subr.bf16.mxu0 0
        %2385 = vmatpush1.bf16.msra.mxu0 %v2375
        %2386 = vmatprep.subr.bf16.mxu0 0
        %2387 = vmatpush1.bf16.msra.mxu0 %v2374
        %2388 = vmatprep.subr.bf16.mxu0 0
        %2389 = vmatpush1.bf16.msra.mxu0 %v2373
        %2390 = vmatprep.subr.bf16.mxu0 0
        %2391 = vmatpush1.bf16.msra.mxu0 %v2372
        %2392 = vmatprep.subr.bf16.mxu0 0
        %2393 = vmatpush1.bf16.msra.mxu0 %v2371
        %2394 = vmatprep.subr.bf16.mxu0 0
        %2395 = vmatpush1.bf16.msra.mxu0 %v2370
        %2396 = vmatprep.subr.bf16.mxu0 0
        %2397 = vmatpush1.bf16.msra.mxu0 %v2369
        %2398 = vmatprep.subr.bf16.mxu0 0
        %2399 = vmatpush1.bf16.msra.mxu0 %v2368
        %2400 = vmatprep.subr.bf16.mxu0 0
        %2401 = vmatpush2.bf16.msra.mxu0 0
        %2402 = vmatprep.subr.bf16.mxu0 0
        %2403 = vmatpush2.bf16.msra.mxu0 0
        %2404 = vmatprep.subr.bf16.mxu0 0
        %2405 = vmatpush2.bf16.msra.mxu0 0
        %2406 = vmatprep.subr.bf16.mxu0 0
        %2407 = vmatpush2.bf16.msra.mxu0 0
        %2408 = vmatprep.subr.bf16.mxu0 0
        %2409 = vmatpush2.bf16.msra.mxu0 0
        %2410 = vmatprep.subr.bf16.mxu0 0
        %2411 = vmatpush2.bf16.msra.mxu0 0
        %2412 = vmatprep.subr.bf16.mxu0 0
        %2413 = vmatpush2.bf16.msra.mxu0 0
        %2414 = vmatprep.subr.bf16.mxu0 0
        %2415 = vmatpush2.bf16.msra.mxu0 0
        %2416 = vmatprep.mubr.bf16.mxu0 0
        %2417 = vmatmul.mubr.bf16.gmra.mxu0 %v2334
        %v2418 = vpop.f32.mrf.mxu0
        %v2419 = vadd.f32 0.0, %v2418
        %v2420 = vpop.f32.mrf.mxu0
        %v2421 = vpop.f32.mrf.mxu0
        %v2422 = vpop.f32.mrf.mxu0
        %2423 = vdwg.mxu0
        %v2424 = vld [vmem:[%s5] sm:$0x1]
        %v2426 = vlaneseq
        %v2427 = vshrl.u32 %v2426, 7
        %v2428 = vsub.s32 0, %v2427
        %v2429 = vrot.slane %v2424, %v2428
        %v2431 = vmul.f32 %v2419, %v2429
        %v2432 = vld [vmem:[%s6] sm:$0x1]
        %v2434 = vlaneseq
        %v2435 = vshrl.u32 %v2434, 7
        %v2436 = vsub.s32 0, %v2435
        %v2437 = vrot.slane %v2432, %v2436
        %v2439 = vadd.f32 %v2431, %v2437
        %v2440 = vmax.f32 %v2439, 0.0
        %v2441 = vpack.c.bf16 %v2440, %v2440
        %v2442 = vld [vmem:[%s7] sm:$0xf]
        %v2443 = vld [vmem:[%s7 + $0x4] sm:$0xf]
        %v2444 = vld [vmem:[%s7 + $0x8] sm:$0xf]
        %v2445 = vld [vmem:[%s7 + $0xc] sm:$0xf]
        %v2446 = vld [vmem:[%s7 + $0x10] sm:$0xf]
        %v2447 = vld [vmem:[%s7 + $0x14] sm:$0xf]
        %v2448 = vld [vmem:[%s7 + $0x18] sm:$0xf]
        %v2449 = vld [vmem:[%s7 + $0x1c] sm:$0xf]
        %v2450 = vld [vmem:[%s7 + $0x20] sm:$0xf]
        %v2451 = vld [vmem:[%s7 + $0x24] sm:$0xf]
        %v2452 = vld [vmem:[%s7 + $0x28] sm:$0xf]
        %v2453 = vld [vmem:[%s7 + $0x2c] sm:$0xf]
        %v2454 = vld [vmem:[%s7 + $0x30] sm:$0xf]
        %v2455 = vld [vmem:[%s7 + $0x34] sm:$0xf]
        %v2456 = vld [vmem:[%s7 + $0x38] sm:$0xf]
        %v2457 = vld [vmem:[%s7 + $0x3c] sm:$0xf]
        %v2474 = vunpack.c.l.b16 %v2442
        %v2475 = vunpack.c.l.b16 %v2443
        %v2476 = vunpack.c.l.b16 %v2444
        %v2477 = vunpack.c.l.b16 %v2445
        %v2478 = vunpack.c.l.b16 %v2446
        %v2479 = vunpack.c.l.b16 %v2447
        %v2480 = vunpack.c.l.b16 %v2448
        %v2481 = vunpack.c.l.b16 %v2449
        %v2482 = vunpack.c.l.b16 %v2450
        %v2483 = vunpack.c.l.b16 %v2451
        %v2484 = vunpack.c.l.b16 %v2452
        %v2485 = vunpack.c.l.b16 %v2453
        %v2486 = vunpack.c.l.b16 %v2454
        %v2487 = vunpack.c.l.b16 %v2455
        %v2488 = vunpack.c.l.b16 %v2456
        %v2489 = vunpack.c.l.b16 %v2457
        %v2490 = vpack.c.b16 %v2475, %v2474
        %v2491 = vpack.c.b16 %v2477, %v2476
        %v2492 = vpack.c.b16 %v2479, %v2478
        %v2493 = vpack.c.b16 %v2481, %v2480
        %v2494 = vpack.c.b16 %v2483, %v2482
        %v2495 = vpack.c.b16 %v2485, %v2484
        %v2496 = vpack.c.b16 %v2487, %v2486
        %v2497 = vpack.c.b16 %v2489, %v2488
        %2506 = vmatprep.subr.bf16.mxu0 0
        %2507 = vmatpush1.bf16.msra.mxu0 %v2497
        %2508 = vmatprep.subr.bf16.mxu0 0
        %2509 = vmatpush1.bf16.msra.mxu0 %v2496
        %2510 = vmatprep.subr.bf16.mxu0 0
        %2511 = vmatpush1.bf16.msra.mxu0 %v2495
        %2512 = vmatprep.subr.bf16.mxu0 0
        %2513 = vmatpush1.bf16.msra.mxu0 %v2494
        %2514 = vmatprep.subr.bf16.mxu0 0
        %2515 = vmatpush1.bf16.msra.mxu0 %v2493
        %2516 = vmatprep.subr.bf16.mxu0 0
        %2517 = vmatpush1.bf16.msra.mxu0 %v2492
        %2518 = vmatprep.subr.bf16.mxu0 0
        %2519 = vmatpush1.bf16.msra.mxu0 %v2491
        %2520 = vmatprep.subr.bf16.mxu0 0
        %2521 = vmatpush1.bf16.msra.mxu0 %v2490
        %2522 = vmatprep.subr.bf16.mxu0 0
        %2523 = vmatpush2.bf16.msra.mxu0 0
        %2524 = vmatprep.subr.bf16.mxu0 0
        %2525 = vmatpush2.bf16.msra.mxu0 0
        %2526 = vmatprep.subr.bf16.mxu0 0
        %2527 = vmatpush2.bf16.msra.mxu0 0
        %2528 = vmatprep.subr.bf16.mxu0 0
        %2529 = vmatpush2.bf16.msra.mxu0 0
        %2530 = vmatprep.subr.bf16.mxu0 0
        %2531 = vmatpush2.bf16.msra.mxu0 0
        %2532 = vmatprep.subr.bf16.mxu0 0
        %2533 = vmatpush2.bf16.msra.mxu0 0
        %2534 = vmatprep.subr.bf16.mxu0 0
        %2535 = vmatpush2.bf16.msra.mxu0 0
        %2536 = vmatprep.subr.bf16.mxu0 0
        %2537 = vmatpush2.bf16.msra.mxu0 0
        %2538 = vmatprep.mubr.bf16.mxu0 0
        %2539 = vmatmul.mubr.bf16.gmra.mxu0 %v2441
        %v2540 = vpop.f32.mrf.mxu0
        %v2541 = vadd.f32 0.0, %v2540
        %v2542 = vpop.f32.mrf.mxu0
        %v2543 = vpop.f32.mrf.mxu0
        %v2544 = vpop.f32.mrf.mxu0
        %2545 = vdwg.mxu0
        %v2546 = vld [vmem:[%s8] sm:$0x1]
        %v2548 = vlaneseq
        %v2549 = vshrl.u32 %v2548, 7
        %v2550 = vsub.s32 0, %v2549
        %v2551 = vrot.slane %v2546, %v2550
        %v2553 = vmul.f32 %v2541, %v2551
        %v2554 = vld [vmem:[%s9] sm:$0x1]
        %v2556 = vlaneseq
        %v2557 = vshrl.u32 %v2556, 7
        %v2558 = vsub.s32 0, %v2557
        %v2559 = vrot.slane %v2554, %v2558
        %v2561 = vadd.f32 %v2553, %v2559
        %v2562 = vmax.f32 %v2561, 0.0
        %v2563 = vpack.c.bf16 %v2562, %v2562
        %v2564 = vld [vmem:[%s10] sm:$0xf]
        %v2565 = vld [vmem:[%s10 + $0x4] sm:$0xf]
        %v2566 = vld [vmem:[%s10 + $0x8] sm:$0xf]
        %v2567 = vld [vmem:[%s10 + $0xc] sm:$0xf]
        %v2568 = vld [vmem:[%s10 + $0x10] sm:$0xf]
        %v2569 = vld [vmem:[%s10 + $0x14] sm:$0xf]
        %v2570 = vld [vmem:[%s10 + $0x18] sm:$0xf]
        %v2571 = vld [vmem:[%s10 + $0x1c] sm:$0xf]
        %v2572 = vld [vmem:[%s10 + $0x20] sm:$0xf]
        %v2573 = vld [vmem:[%s10 + $0x24] sm:$0xf]
        %v2574 = vld [vmem:[%s10 + $0x28] sm:$0xf]
        %v2575 = vld [vmem:[%s10 + $0x2c] sm:$0xf]
        %v2576 = vld [vmem:[%s10 + $0x30] sm:$0xf]
        %v2577 = vld [vmem:[%s10 + $0x34] sm:$0xf]
        %v2578 = vld [vmem:[%s10 + $0x38] sm:$0xf]
        %v2579 = vld [vmem:[%s10 + $0x3c] sm:$0xf]
        %v2580 = vld [vmem:[%s11] sm:$0x1]
        %v2582 = vlaneseq
        %v2583 = vshrl.u32 %v2582, 7
        %v2584 = vsub.s32 0, %v2583
        %v2585 = vrot.slane %v2580, %v2584
        %v2603 = vunpack.c.l.b16 %v2564
        %v2604 = vunpack.c.l.b16 %v2565
        %v2605 = vunpack.c.l.b16 %v2566
        %v2606 = vunpack.c.l.b16 %v2567
        %v2607 = vunpack.c.l.b16 %v2568
        %v2608 = vunpack.c.l.b16 %v2569
        %v2609 = vunpack.c.l.b16 %v2570
        %v2610 = vunpack.c.l.b16 %v2571
        %v2611 = vunpack.c.l.b16 %v2572
        %v2612 = vunpack.c.l.b16 %v2573
        %v2613 = vunpack.c.l.b16 %v2574
        %v2614 = vunpack.c.l.b16 %v2575
        %v2615 = vunpack.c.l.b16 %v2576
        %v2616 = vunpack.c.l.b16 %v2577
        %v2617 = vunpack.c.l.b16 %v2578
        %v2618 = vunpack.c.l.b16 %v2579
        %v2619 = vpack.c.b16 %v2604, %v2603
        %v2620 = vpack.c.b16 %v2606, %v2605
        %v2621 = vpack.c.b16 %v2608, %v2607
        %v2622 = vpack.c.b16 %v2610, %v2609
        %v2623 = vpack.c.b16 %v2612, %v2611
        %v2624 = vpack.c.b16 %v2614, %v2613
        %v2625 = vpack.c.b16 %v2616, %v2615
        %v2626 = vpack.c.b16 %v2618, %v2617
        %2635 = vmatprep.subr.bf16.mxu0 0
        %2636 = vmatpush1.bf16.msra.mxu0 %v2626
        %2637 = vmatprep.subr.bf16.mxu0 0
        %2638 = vmatpush1.bf16.msra.mxu0 %v2625
        %2639 = vmatprep.subr.bf16.mxu0 0
        %2640 = vmatpush1.bf16.msra.mxu0 %v2624
        %2641 = vmatprep.subr.bf16.mxu0 0
        %2642 = vmatpush1.bf16.msra.mxu0 %v2623
        %2643 = vmatprep.subr.bf16.mxu0 0
        %2644 = vmatpush1.bf16.msra.mxu0 %v2622
        %2645 = vmatprep.subr.bf16.mxu0 0
        %2646 = vmatpush1.bf16.msra.mxu0 %v2621
        %2647 = vmatprep.subr.bf16.mxu0 0
        %2648 = vmatpush1.bf16.msra.mxu0 %v2620
        %2649 = vmatprep.subr.bf16.mxu0 0
        %2650 = vmatpush1.bf16.msra.mxu0 %v2619
        %2651 = vmatprep.subr.bf16.mxu0 0
        %2652 = vmatpush2.bf16.msra.mxu0 0
        %2653 = vmatprep.subr.bf16.mxu0 0
        %2654 = vmatpush2.bf16.msra.mxu0 0
        %2655 = vmatprep.subr.bf16.mxu0 0
        %2656 = vmatpush2.bf16.msra.mxu0 0
        %2657 = vmatprep.subr.bf16.mxu0 0
        %2658 = vmatpush2.bf16.msra.mxu0 0
        %2659 = vmatprep.subr.bf16.mxu0 0
        %2660 = vmatpush2.bf16.msra.mxu0 0
        %2661 = vmatprep.subr.bf16.mxu0 0
        %2662 = vmatpush2.bf16.msra.mxu0 0
        %2663 = vmatprep.subr.bf16.mxu0 0
        %2664 = vmatpush2.bf16.msra.mxu0 0
        %2665 = vmatprep.subr.bf16.mxu0 0
        %2666 = vmatpush2.bf16.msra.mxu0 0
        %2667 = vmatprep.mubr.bf16.mxu0 0
        %2668 = vmatmul.mubr.bf16.gmra.mxu0 %v2563
        %v2669 = vpop.f32.mrf.mxu0
        %v2670 = vadd.f32 %v2585, %v2669
        %v2671 = vpop.f32.mrf.mxu0
        %v2672 = vpop.f32.mrf.mxu0
        %v2673 = vpop.f32.mrf.mxu0
        %2674 = vdwg.mxu0
        %vm2675 = vcmask 1041408
        %v2676 = vsel %vm2675, %v2670, -inf
        %2677 = vmax.xlane.f32.xlu0 %v2676
        %v2678 = vpop.xlane.xlu0 %2677
        %v2679 = vsub.f32 %v2670, %v2678
        %v2680 = vmul.f32 %v2679, 1.442695
        %v2681 = vpow.pop %v2680
        %v2682 = vsel %vm2675, %v2681, 0.0
        %2683 = vadd.xlane.f32.xlu0 %v2682
        %v2684 = vpop.xlane.xlu0 %2683
        %v2685 = vrcp.pop %v2684
        %v2686 = vmul.f32 %v2681, %v2685
        %v2687 = vpack.c.bf16 %v2686, %v2686
        %2688 = vst [vmem:[%s408] sm:$0x1] %v2687
        %s2689 = sand.u32 %s291, 1
        %s2690 = scalar_lea.sflag [#allocation3], %s2689
        %s2691 = sand.u32 %s291, 1
        %s2692 = scalar_lea.vmem [#allocation2], %s2691
        // Predicated region
        $region69: #{tpu_custom_call.1} parent=67 // pred_check
          %p2693 = pneg %p301
        $region70: #{tpu_custom_call.1} parent=67 // pred_check_branch
          %2695 = sbr.rel (%p2693) target = $region72
        $region71: #{tpu_custom_call.1} parent=67 // pred_region
          %s2697 = ssub.s32 16, 16
          %2698 = vsyncadd %s2690, %s2697
          %s2699 = smul.addr %s26, 16
          %s2700 = scalar_lea.hbm %s12, %s2699
          %s2702 = sshll.u32 %s2692, 4
          %s2703 = int_to_ptr.vmem [resolvable:$true] %s2702
          %2705 = dma.vmem_to_hbm [thread:$0]  %s2703, 16, %s2700, %s2690
        $region72: #{tpu_custom_call.1} parent=67 // pred_fallthru
          _
      $region68: #{tpu_custom_call.1} parent=5 // pred_fallthru
        _
      %p2706 = scmp.le.s32.totalorder 2, %s21
      // Predicated region
      $region73: #{tpu_custom_call.1} parent=5 // pred_check
        %p2707 = pneg %p2706
      $region74: #{tpu_custom_call.1} parent=5 // pred_check_branch
        %2709 = sbr.rel (%p2707) target = $region76
      $region75: #{tpu_custom_call.1} parent=5 // pred_region
        %s2710 = ssub.s32 %s21, 2
        // Predicated region
        $region77: #{tpu_custom_call.1} parent=75 // pred_check
          %p2711 = pneg %p307
        $region78: #{tpu_custom_call.1} parent=75 // pred_check_branch
          %2713 = sbr.rel (%p2711) target = $region80
        $region79: #{tpu_custom_call.1} parent=75 // pred_region
          %s2714 = sand.u32 %s292, 1
          %s2715 = scalar_lea.sflag [#allocation3], %s2714
          %s2716 = sand.u32 %s292, 1
          %s2717 = scalar_lea.vmem [#allocation2], %s2716
          %2718 = dma.done %s2715, 16
        $region80: #{tpu_custom_call.1} parent=75 // pred_fallthru
          _
      $region76: #{tpu_custom_call.1} parent=5 // pred_fallthru
        _
    $region6: #{tpu_custom_call.1} parent=1 // loop_footer
      %s25 = sadd.s32 1, %s21
    $region7: #{tpu_custom_call.1} parent=1 // loop_footer_branch
      %20 = sbr.rel target = $region3
    $region8: #{tpu_custom_call.1} parent=1 // loop_exit
      _
    %2719 = vsyncpa [#allocation3], 1
    %s2720 = scalar_lea.sflag [#allocation3], 1
    %2721 = vsyncpa %s2720, 1

</llo_original>
